<compile_context>
chip_gen: v5e
topology: v5e:2x2
jax: 0.10.0
libtpu: 0.0.40
codegen_flags: <defaults>
</compile_context>

<pallas_src>
import functools
import math

import jax
import jax.numpy as jnp
import numpy as np
from jax import lax
from jax.experimental import pallas as pl
from jax.experimental.pallas import tpu as pltpu


# ---------------------------------------------------------------------------
# Kernel 1: fused, tiled QKV projection  (M, K) @ (K, 3D) + (1, 3D)
# ---------------------------------------------------------------------------
def _matmul_bias_kernel(x_ref, w_ref, b_ref, o_ref, acc_ref):
    @pl.when(pl.program_id(2) == 0)
    def _init():
        acc_ref[...] = jnp.zeros_like(acc_ref)

    acc_ref[...] += jnp.dot(x_ref[...], w_ref[...],
                            preferred_element_type=jnp.float32)

    @pl.when(pl.program_id(2) == pl.num_programs(2) - 1)
    def _store():
        o_ref[...] = acc_ref[...] + b_ref[...]


def _pick_tile(dim, candidates):
    for t in candidates:
        if t <= dim and dim % t == 0:
            return t
    # TODO(synk): non-dividing dims fall back to a single full-dim tile; a pl.cdiv grid
    # with wrapper-side padding would bound VMEM for awkward shapes.
    return dim


def matmul_bias(x, w, b):
    """Tiled/pipelined matmul+bias with a K-axis f32 accumulator."""
    M, K = x.shape
    N = w.shape[1]
    tm = _pick_tile(M, (256, 128, 64, 32, 16, 8))
    tn = _pick_tile(N, (512, 256, 128))
    tk = _pick_tile(K, (512, 256, 128))
    grid = (M // tm, N // tn, K // tk)
    return pl.pallas_call(
        _matmul_bias_kernel,
        out_shape=jax.ShapeDtypeStruct((M, N), jnp.float32),
        grid=grid,
        in_specs=[
            pl.BlockSpec((tm, tk), lambda i, j, k: (i, k)),
            pl.BlockSpec((tk, tn), lambda i, j, k: (k, j)),
            pl.BlockSpec((1, tn), lambda i, j, k: (0, j)),
        ],
        out_specs=pl.BlockSpec((tm, tn), lambda i, j, k: (i, j)),
        scratch_shapes=[pltpu.VMEM((tm, tn), jnp.float32)],
        compiler_params=pltpu.CompilerParams(
            dimension_semantics=("parallel", "parallel", "arbitrary"),
            vmem_limit_bytes=40 * 1024 * 1024,
        ),
    )(x, w, b)


# ---------------------------------------------------------------------------
# Kernel 2: per-(batch, head) LayerNorm((L, d), no affine, eps=1e-5) + mu-projection.
# Only the (kk, L) cluster logits leave the kernel (Qn/Kn never hit HBM).
# ---------------------------------------------------------------------------
def _ln_logits_kernel(q_ref, k_ref, mu_ref, qp_ref, kp_ref):
    mu = mu_ref[...]                                          # (kk, d)

    def ln_proj(x):
        m = jnp.mean(x, keepdims=True)                        # (1, 1)
        v = jnp.mean((x - m) ** 2, keepdims=True)             # (1, 1)
        xn = (x - m) * lax.rsqrt(v + 1e-5)                    # (L, d)
        # mu @ xn^T -> (kk, L) cluster logits
        return lax.dot_general(mu, xn, (((1,), (1,)), ((), ())),
                               preferred_element_type=jnp.float32)

    qp_ref[...] = ln_proj(q_ref[...])
    kp_ref[...] = ln_proj(k_ref[...])


def ln_cluster_logits(Q, K, mu):
    B, H, L, d = Q.shape
    kk = mu.shape[0]
    return pl.pallas_call(
        _ln_logits_kernel,
        out_shape=(
            jax.ShapeDtypeStruct((B, H, kk, L), jnp.float32),
            jax.ShapeDtypeStruct((B, H, kk, L), jnp.float32),
        ),
        grid=(B, H),
        in_specs=[
            pl.BlockSpec((None, None, L, d), lambda b, h: (b, h, 0, 0)),
            pl.BlockSpec((None, None, L, d), lambda b, h: (b, h, 0, 0)),
            pl.BlockSpec((kk, d), lambda b, h: (0, 0)),
        ],
        out_specs=(
            pl.BlockSpec((None, None, kk, L), lambda b, h: (b, h, 0, 0)),
            pl.BlockSpec((None, None, kk, L), lambda b, h: (b, h, 0, 0)),
        ),
        compiler_params=pltpu.CompilerParams(
            dimension_semantics=("parallel", "parallel"),
            vmem_limit_bytes=32 * 1024 * 1024,
        ),
    )(Q, K, mu)


# ---------------------------------------------------------------------------
# Kernel 3: clustered attention for one (batch, head) pair.
#   LN stats over the (L, d) slab -> kw dynamic row gathers (SMEM indices)
#   -> normalize only the gathered rows -> per-cluster block-diagonal softmax
#   attention (exact division) -> scatter-add as one-hot^T matmul -> *1e5
#   (the module's zero-denominator scatter normalization, i.e. /(0 + 1e-5)).
# ---------------------------------------------------------------------------
def _att_kernel(qi_ref, ki_ref, q_ref, k_ref, v_ref, o_ref, *,
                n_head, n_cluster, w):
    L, d = q_ref.shape
    kw = n_cluster * w
    b = pl.program_id(0)
    h = pl.program_id(1)
    base = (b * n_head + h) * kw                              # flat SMEM index base

    def ln_stats(x):
        m = jnp.mean(x, keepdims=True)                        # (1, 1)
        v = jnp.mean((x - m) ** 2, keepdims=True)
        return m, lax.rsqrt(v + 1e-5)

    mq, rq = ln_stats(q_ref[...])
    mk, rk = ln_stats(k_ref[...])

    # --- gather kw rows with dynamic slices (indices are SMEM scalars) ---
    q_rows = jnp.concatenate(
        [q_ref[pl.ds(qi_ref[base + i], 1), :] for i in range(kw)], axis=0)   # (kw, d)
    k_rows = jnp.concatenate(
        [k_ref[pl.ds(ki_ref[base + i], 1), :] for i in range(kw)], axis=0)   # (kw, d)
    v_rows = jnp.concatenate(
        [v_ref[pl.ds(ki_ref[base + i], 1), :] for i in range(kw)], axis=0)   # (kw, d)

    qd = ((q_rows - mq) * rq).reshape(n_cluster, w, d)
    kd = ((k_rows - mk) * rk).reshape(n_cluster, w, d)
    vd = v_rows.reshape(n_cluster, w, d)

    # --- per-cluster (block-diagonal) attention: no (kw,kw) matmul, no mask ---
    s = lax.dot_general(qd, kd, (((2,), (2,)), ((0,), (0,))),
                        preferred_element_type=jnp.float32)    # (kk, w, w)
    m = jnp.max(s, axis=-1, keepdims=True)
    p = jnp.exp(s - m)
    a = p / jnp.sum(p, axis=-1, keepdims=True)                 # EXACT division (fix)
    o_small = lax.dot_general(a, vd, (((2,), (1,)), ((0,), (0,))),
                              preferred_element_type=jnp.float32)  # (kk, w, d)
    o_small = o_small.reshape(kw, d)

    # --- scatter-add along the sequence dim as one-hot^T matmul (dense store).
    #     One-hot rows rebuilt in-kernel from the SMEM index scalars.
    col = lax.broadcasted_iota(jnp.int32, (1, L), 1)
    oh = jnp.concatenate(
        [(col == ki_ref[base + i]).astype(jnp.float32) for i in range(kw)],
        axis=0)                                                # (kw, L)
    x_full = lax.dot_general(oh, o_small, (((0,), (0,)), ((), ())),
                             preferred_element_type=jnp.float32)   # (L, d)

    # scatter denominator buffer is all zeros -> /(0 + 1e-5) == * 1e5
    o_ref[...] = x_full * jnp.float32(1e5)


def clustered_attention(Q, K, V, Qi, Ki, *, n_cluster, w):
    B, H, L, d = Q.shape
    kern = functools.partial(_att_kernel, n_head=H, n_cluster=n_cluster, w=w)
    grid_spec = pltpu.PrefetchScalarGridSpec(
        num_scalar_prefetch=2,                                 # Qi, Ki -> SMEM
        grid=(B, H),
        in_specs=[
            pl.BlockSpec((None, None, L, d), lambda b, h, qi, ki: (b, h, 0, 0)),
            pl.BlockSpec((None, None, L, d), lambda b, h, qi, ki: (b, h, 0, 0)),
            pl.BlockSpec((None, None, L, d), lambda b, h, qi, ki: (b, h, 0, 0)),
        ],
        out_specs=pl.BlockSpec((None, None, L, d), lambda b, h, qi, ki: (b, h, 0, 0)),
    )
    return pl.pallas_call(
        kern,
        out_shape=jax.ShapeDtypeStruct((B, H, L, d), jnp.float32),
        grid_spec=grid_spec,
        compiler_params=pltpu.CompilerParams(
            dimension_semantics=("parallel", "parallel"),
            vmem_limit_bytes=32 * 1024 * 1024,
        ),
    )(Qi.reshape(-1), Ki.reshape(-1), Q, K, V)


# ---------------------------------------------------------------------------
# Parameter prep (hoisted out of the forward pass, done once).
# ---------------------------------------------------------------------------
def pack_params(params):
    Wqkv = jnp.concatenate([params["Wq"], params["Wk"], params["Wv"]], axis=1)
    bqkv = jnp.concatenate([params["bq"], params["bk"], params["bv"]])[None, :]
    return {"Wqkv": Wqkv, "bqkv": bqkv, "mu": params["mu"]}


# ---------------------------------------------------------------------------
# Full forward (KMeansMHA with is_left_to_right=False, is_share_qk=False)
# ---------------------------------------------------------------------------
def kmeans_mha_forward(x, packed, *, n_head, window_size):
    B, L, D = x.shape
    H = n_head
    d = D // H
    kk = L // window_size          # number of clusters (self.k)
    assert L % window_size == 0 and H % kk == 0, "config must divide as in the module"
    w = H // kk                    # tokens gathered per cluster (self.w)
    kw = kk * w

    # --- fused QKV projection (tiled / pipelined Pallas matmul) ---
    qkv = matmul_bias(x.reshape(B * L, D), packed["Wqkv"], packed["bqkv"])
    q, k, v = jnp.split(qkv, 3, axis=1)

    def split_heads(t):
        return t.reshape(B, L, H, d).transpose(0, 2, 1, 3)     # (B, H, L, d)

    Q, K, V = split_heads(q), split_heads(k), split_heads(v)

    # --- fused LayerNorm + mu-projection -> (B, H, kk, L) cluster logits ---
    qp, kp = ln_cluster_logits(Q, K, packed["mu"])

    # --- top-k / sort index selection (plain JAX glue; no Pallas TPU top_k) ---
    _, Qi = jax.lax.top_k(qp, w)
    Qi = jnp.sort(Qi, axis=-1).reshape(B, H, kw).astype(jnp.int32)
    _, Ki = jax.lax.top_k(kp, w)
    Ki = jnp.sort(Ki, axis=-1).reshape(B, H, kw).astype(jnp.int32)

    # TODO(synk): mu EMA buffer update (decay*mu + ...) is a training-time side effect
    # that does not change the forward output; omitted.
    # TODO(synk): is_left_to_right causal branch skipped (module default is False and
    # the original code references self.mask before registering it).

    # --- per-(b, h) LN-recompute + clustered attention + scatter ---
    Xh = clustered_attention(Q, K, V, Qi, Ki, n_cluster=kk, w=w)   # (B, H, L, d)
    return Xh.transpose(0, 2, 1, 3).reshape(B, L, D)


# ---------------------------------------------------------------------------
# Pure-JAX reference (mirrors the PyTorch forward semantics directly)
# ---------------------------------------------------------------------------
def reference_forward(x, params, *, n_head, window_size):
    B, L, D = x.shape
    H = n_head
    d = D // H
    kk = L // window_size
    w = H // kk
    kw = kk * w

    q = x @ params["Wq"] + params["bq"]
    k = x @ params["Wk"] + params["bk"]
    v = x @ params["Wv"] + params["bv"]

    def split(t):
        return t.reshape(B, L, H, d).transpose(0, 2, 1, 3)

    Q, K, V = split(q), split(k), split(v)

    def ln(t):
        m = t.mean(axis=(2, 3), keepdims=True)
        var = ((t - m) ** 2).mean(axis=(2, 3), keepdims=True)
        return (t - m) / jnp.sqrt(var + 1e-5)

    Qn, Kn = ln(Q), ln(K)
    mu = params["mu"]
    Qp = jnp.einsum("cd,bhld->bhcl", mu, Qn)
    Kp = jnp.einsum("cd,bhld->bhcl", mu, Kn)
    _, Qi = jax.lax.top_k(Qp, w)
    Qi = jnp.sort(Qi, axis=-1).reshape(B, H, kw)
    _, Ki = jax.lax.top_k(Kp, w)
    Ki = jnp.sort(Ki, axis=-1).reshape(B, H, kw)

    Qd = jnp.take_along_axis(Qn, Qi[..., None], axis=2).reshape(B, H, kk, w, d)
    Kd = jnp.take_along_axis(Kn, Ki[..., None], axis=2).reshape(B, H, kk, w, d)
    Vd = jnp.take_along_axis(V, Ki[..., None], axis=2).reshape(B, H, kk, w, d)

    A = jnp.einsum("bhkwd,bhkvd->bhkwv", Qd, Kd)
    A = jax.nn.softmax(A, axis=-1)
    Vo = jnp.einsum("bhkwv,bhkvd->bhkwd", A, Vd).reshape(B, H, kw, d)

    base = jnp.zeros((B, H, L, d), jnp.float32)
    bidx = jnp.arange(B)[:, None, None, None]
    hidx = jnp.arange(H)[None, :, None, None]
    didx = jnp.arange(d)[None, None, None, :]
    sidx = Ki[..., None]
    numer = base.at[bidx, hidx, sidx, didx].add(Vo)
    X = numer / 1e-5
    return X.transpose(0, 2, 1, 3).reshape(B, L, D)


if __name__ == "__main__":
    # Small config consistent with the module: D=32, H=4, L=16, window=8
    #   -> k = L//window = 2 clusters, w = H//k = 2 tokens gathered per cluster.
    B, L, D, H, WIN = 2, 16, 32, 4, 8
    key = jax.random.PRNGKey(0)
    kx, kwq, kwk, kwv, kbq, kbk, kbv, kmu = jax.random.split(key, 8)
    bound = 1.0 / math.sqrt(D)

    x = jax.random.normal(kx, (B, L, D), dtype=jnp.float32)
    params = dict(
        Wq=jax.random.uniform(kwq, (D, D), jnp.float32, -bound, bound),
        Wk=jax.random.uniform(kwk, (D, D), jnp.float32, -bound, bound),
        Wv=jax.random.uniform(kwv, (D, D), jnp.float32, -bound, bound),
        bq=jax.random.uniform(kbq, (D,), jnp.float32, -bound, bound),
        bk=jax.random.uniform(kbk, (D,), jnp.float32, -bound, bound),
        bv=jax.random.uniform(kbv, (D,), jnp.float32, -bound, bound),
        mu=jax.random.uniform(kmu, (L // WIN, D // H), jnp.float32),  # torch.rand
    )
    packed = pack_params(params)   # one-time param prep (hoisted out of forward)

    fwd = jax.jit(functools.partial(kmeans_mha_forward, n_head=H, window_size=WIN))
    out = fwd(x, packed)
    out = jax.block_until_ready(out)

    ref = reference_forward(x, params, n_head=H, window_size=WIN)
    np.testing.assert_allclose(np.asarray(out), np.asarray(ref), rtol=2e-3, atol=1e-1)

    print("KERNEL_OK")
</pallas_src>

<mosaic_0001>
module attributes {stable_mosaic.version = 11 : i64} {
  func.func @_matmul_bias_kernel(%arg0: i32, %arg1: i32, %arg2: i32, %arg3: memref<32x32xf32, #tpu.memory_space<vmem>>, %arg4: memref<32x96xf32, #tpu.memory_space<vmem>>, %arg5: memref<1x96xf32, #tpu.memory_space<vmem>>, %arg6: memref<32x96xf32, #tpu.memory_space<vmem>>, %arg7: memref<32x96xf32, #tpu.memory_space<vmem>>) attributes {dimension_semantics = [#tpu.dimension_semantics<parallel>, #tpu.dimension_semantics<parallel>, #tpu.dimension_semantics<arbitrary>], iteration_bounds = array<i64: 1, 1, 1>, scalar_prefetch = 0 : i64, scratch_operands = 1 : i64, tpu.core_type = #tpu.core_type<tc>, window_params = [{transform_indices = @transform_0, window_bounds = array<i64: 32, 32>}, {transform_indices = @transform_1, window_bounds = array<i64: 32, 96>}, {transform_indices = @transform_2, window_bounds = array<i64: 1, 96>}, {transform_indices = @transform_3, window_bounds = array<i64: 32, 96>}]} {
    %c0_i32 = arith.constant 0 : i32
    %0 = arith.cmpi eq, %arg2, %c0_i32 : i32
    %1 = arith.extui %0 : i1 to i32
    %c0_i32_0 = arith.constant 0 : i32
    %2 = arith.cmpi ne, %1, %c0_i32_0 : i32
    scf.if %2 {
      %cst_10 = arith.constant 0.000000e+00 : f32
      %12 = vector.broadcast %cst_10 : f32 to vector<32x96xf32>
      %c0_11 = arith.constant 0 : index
      %c0_12 = arith.constant 0 : index
      %13 = vector.load %arg7[%c0_11, %c0_12] : memref<32x96xf32, #tpu.memory_space<vmem>>, vector<32x96xf32>
      tpu.vector_store %arg7[%c0_11, %c0_12], %12 {strides = array<i32>} : memref<32x96xf32, #tpu.memory_space<vmem>>, vector<32x96xf32>,
    } else {
    }
    %c0 = arith.constant 0 : index
    %c0_1 = arith.constant 0 : index
    %3 = vector.load %arg7[%c0, %c0_1] : memref<32x96xf32, #tpu.memory_space<vmem>>, vector<32x96xf32>
    %c0_2 = arith.constant 0 : index
    %c0_3 = arith.constant 0 : index
    %4 = vector.load %arg3[%c0_2, %c0_3] : memref<32x32xf32, #tpu.memory_space<vmem>>, vector<32x32xf32>
    %c0_4 = arith.constant 0 : index
    %c0_5 = arith.constant 0 : index
    %5 = vector.load %arg4[%c0_4, %c0_5] : memref<32x96xf32, #tpu.memory_space<vmem>>, vector<32x96xf32>
    %cst = arith.constant dense<0.000000e+00> : vector<32x96xf32>
    %6 = tpu.matmul %4, %5, %cst {dimension_numbers = #tpu.dot_dimension_numbers<[1], [0], [0], [1], [0, 0, 1, 1], [], []>} : vector<32x32xf32>, vector<32x96xf32>, vector<32x96xf32> -> vector<32x96xf32>
    %7 = arith.addf %3, %6 : vector<32x96xf32>
    %c0_6 = arith.constant 0 : index
    %c0_7 = arith.constant 0 : index
    %8 = vector.load %arg7[%c0_6, %c0_7] : memref<32x96xf32, #tpu.memory_space<vmem>>, vector<32x96xf32>
    tpu.vector_store %arg7[%c0_6, %c0_7], %7 {strides = array<i32>} : memref<32x96xf32, #tpu.memory_space<vmem>>, vector<32x96xf32>,
    %c0_i32_8 = arith.constant 0 : i32
    %9 = arith.cmpi eq, %arg2, %c0_i32_8 : i32
    %10 = arith.extui %9 : i1 to i32
    %c0_i32_9 = arith.constant 0 : i32
    %11 = arith.cmpi ne, %10, %c0_i32_9 : i32
    scf.if %11 {
      %c0_10 = arith.constant 0 : index
      %c0_11 = arith.constant 0 : index
      %12 = vector.load %arg7[%c0_10, %c0_11] : memref<32x96xf32, #tpu.memory_space<vmem>>, vector<32x96xf32>
      %c0_12 = arith.constant 0 : index
      %c0_13 = arith.constant 0 : index
      %13 = vector.load %arg5[%c0_12, %c0_13] : memref<1x96xf32, #tpu.memory_space<vmem>>, vector<1x96xf32>
      %14 = vector.broadcast %13 : vector<1x96xf32> to vector<32x96xf32>
      %15 = arith.addf %12, %14 : vector<32x96xf32>
      %c0_14 = arith.constant 0 : index
      %c0_15 = arith.constant 0 : index
      %16 = vector.load %arg6[%c0_14, %c0_15] : memref<32x96xf32, #tpu.memory_space<vmem>>, vector<32x96xf32>
      tpu.vector_store %arg6[%c0_14, %c0_15], %15 {strides = array<i32>} : memref<32x96xf32, #tpu.memory_space<vmem>>, vector<32x96xf32>,
    } else {
    }
    return
  }
  func.func @transform_0(%arg0: i32, %arg1: i32, %arg2: i32) -> (i32, i32) {
    %c0_i32 = arith.constant 0 : i32
    return %arg0, %arg2 : i32, i32
  }
  func.func @transform_1(%arg0: i32, %arg1: i32, %arg2: i32) -> (i32, i32) {
    %c0_i32 = arith.constant 0 : i32
    return %arg2, %arg1 : i32, i32
  }
  func.func @transform_2(%arg0: i32, %arg1: i32, %arg2: i32) -> (i32, i32) {
    %c0_i32 = arith.constant 0 : i32
    %c0_i32_0 = arith.constant 0 : i32
    return %c0_i32, %arg1 : i32, i32
  }
  func.func @transform_3(%arg0: i32, %arg1: i32, %arg2: i32) -> (i32, i32) {
    %c0_i32 = arith.constant 0 : i32
    return %arg0, %arg1 : i32, i32
  }
}

module attributes {stable_mosaic.version = 11 : i64} {
  func.func @_ln_logits_kernel(%arg0: i32, %arg1: i32, %arg2: memref<1x1x16x8xf32, #tpu.memory_space<vmem>>, %arg3: memref<1x1x16x8xf32, #tpu.memory_space<vmem>>, %arg4: memref<2x8xf32, #tpu.memory_space<vmem>>, %arg5: memref<1x1x2x16xf32, #tpu.memory_space<vmem>>, %arg6: memref<1x1x2x16xf32, #tpu.memory_space<vmem>>) attributes {dimension_semantics = [#tpu.dimension_semantics<parallel>, #tpu.dimension_semantics<parallel>], iteration_bounds = array<i64: 2, 4>, scalar_prefetch = 0 : i64, scratch_operands = 0 : i64, tpu.core_type = #tpu.core_type<tc>, window_params = [{transform_indices = @transform_0, window_bounds = array<i64: 1, 1, 16, 8>}, {transform_indices = @transform_1, window_bounds = array<i64: 1, 1, 16, 8>}, {pipeline_mode = #tpu.pipeline_mode<synchronous>, transform_indices = @transform_2, window_bounds = array<i64: 2, 8>}, {transform_indices = @transform_3, window_bounds = array<i64: 1, 1, 2, 16>}, {transform_indices = @transform_4, window_bounds = array<i64: 1, 1, 2, 16>}]} {
    %c0 = arith.constant 0 : index
    %c0_0 = arith.constant 0 : index
    %0 = vector.load %arg4[%c0, %c0_0] : memref<2x8xf32, #tpu.memory_space<vmem>>, vector<2x8xf32>
    %c0_1 = arith.constant 0 : index
    %c0_2 = arith.constant 0 : index
    %c0_3 = arith.constant 0 : index
    %c0_4 = arith.constant 0 : index
    %1 = vector.load %arg2[%c0_1, %c0_2, %c0_3, %c0_4] : memref<1x1x16x8xf32, #tpu.memory_space<vmem>>, vector<1x1x16x8xf32>
    %2 = vector.shape_cast %1 : vector<1x1x16x8xf32> to vector<16x8xf32>
    %3 = vector.shape_cast %2 : vector<16x8xf32> to vector<1x16x8xf32>
    %cst = arith.constant dense<0.000000e+00> : vector<1xf32>
    %4 = vector.multi_reduction <add>, %3, %cst [1, 2] : vector<1x16x8xf32> to vector<1xf32>
    %5 = vector.shape_cast %4 : vector<1xf32> to vector<1x1x1xf32>
    %6 = vector.extract %5[0, 0, 0] : f32 from vector<1x1x1xf32>
    %7 = vector.broadcast %6 : f32 to vector<1x1xf32>
    %cst_5 = arith.constant 1.280000e+02 : f32
    %8 = vector.broadcast %cst_5 : f32 to vector<1x1xf32>
    %9 = arith.divf %7, %8 : vector<1x1xf32>
    %10 = vector.broadcast %9 : vector<1x1xf32> to vector<16x8xf32>
    %11 = arith.subf %2, %10 : vector<16x8xf32>
    %12 = arith.mulf %11, %11 : vector<16x8xf32>
    %13 = vector.shape_cast %12 : vector<16x8xf32> to vector<1x16x8xf32>
    %cst_6 = arith.constant dense<0.000000e+00> : vector<1xf32>
    %14 = vector.multi_reduction <add>, %13, %cst_6 [1, 2] : vector<1x16x8xf32> to vector<1xf32>
    %15 = vector.shape_cast %14 : vector<1xf32> to vector<1x1x1xf32>
    %16 = vector.extract %15[0, 0, 0] : f32 from vector<1x1x1xf32>
    %17 = vector.broadcast %16 : f32 to vector<1x1xf32>
    %cst_7 = arith.constant 1.280000e+02 : f32
    %18 = vector.broadcast %cst_7 : f32 to vector<1x1xf32>
    %19 = arith.divf %17, %18 : vector<1x1xf32>
    %20 = vector.broadcast %9 : vector<1x1xf32> to vector<16x8xf32>
    %21 = arith.subf %2, %20 : vector<16x8xf32>
    %cst_8 = arith.constant 9.99999974E-6 : f32
    %22 = vector.broadcast %cst_8 : f32 to vector<1x1xf32>
    %23 = arith.addf %19, %22 : vector<1x1xf32>
    %24 = math.rsqrt %23 : vector<1x1xf32>
    %25 = vector.broadcast %24 : vector<1x1xf32> to vector<16x8xf32>
    %26 = arith.mulf %21, %25 : vector<16x8xf32>
    %cst_9 = arith.constant dense<0.000000e+00> : vector<2x16xf32>
    %27 = tpu.matmul %0, %26, %cst_9 {dimension_numbers = #tpu.dot_dimension_numbers<[1], [1], [0], [0], [0, 0, 1, 0], [], []>} : vector<2x8xf32>, vector<16x8xf32>, vector<2x16xf32> -> vector<2x16xf32>
    %c0_10 = arith.constant 0 : index
    %c0_11 = arith.constant 0 : index
    %c0_12 = arith.constant 0 : index
    %c0_13 = arith.constant 0 : index
    %28 = vector.load %arg5[%c0_10, %c0_11, %c0_12, %c0_13] : memref<1x1x2x16xf32, #tpu.memory_space<vmem>>, vector<1x1x2x16xf32>
    %29 = vector.shape_cast %28 : vector<1x1x2x16xf32> to vector<2x16xf32>
    %30 = vector.shape_cast %27 : vector<2x16xf32> to vector<1x1x2x16xf32>
    tpu.vector_store %arg5[%c0_10, %c0_11, %c0_12, %c0_13], %30 {strides = array<i32>} : memref<1x1x2x16xf32, #tpu.memory_space<vmem>>, vector<1x1x2x16xf32>,
    %c0_14 = arith.constant 0 : index
    %c0_15 = arith.constant 0 : index
    %c0_16 = arith.constant 0 : index
    %c0_17 = arith.constant 0 : index
    %31 = vector.load %arg3[%c0_14, %c0_15, %c0_16, %c0_17] : memref<1x1x16x8xf32, #tpu.memory_space<vmem>>, vector<1x1x16x8xf32>
    %32 = vector.shape_cast %31 : vector<1x1x16x8xf32> to vector<16x8xf32>
    %33 = vector.shape_cast %32 : vector<16x8xf32> to vector<1x16x8xf32>
    %cst_18 = arith.constant dense<0.000000e+00> : vector<1xf32>
    %34 = vector.multi_reduction <add>, %33, %cst_18 [1, 2] : vector<1x16x8xf32> to vector<1xf32>
    %35 = vector.shape_cast %34 : vector<1xf32> to vector<1x1x1xf32>
    %36 = vector.extract %35[0, 0, 0] : f32 from vector<1x1x1xf32>
    %37 = vector.broadcast %36 : f32 to vector<1x1xf32>
    %cst_19 = arith.constant 1.280000e+02 : f32
    %38 = vector.broadcast %cst_19 : f32 to vector<1x1xf32>
    %39 = arith.divf %37, %38 : vector<1x1xf32>
    %40 = vector.broadcast %39 : vector<1x1xf32> to vector<16x8xf32>
    %41 = arith.subf %32, %40 : vector<16x8xf32>
    %42 = arith.mulf %41, %41 : vector<16x8xf32>
    %43 = vector.shape_cast %42 : vector<16x8xf32> to vector<1x16x8xf32>
    %cst_20 = arith.constant dense<0.000000e+00> : vector<1xf32>
    %44 = vector.multi_reduction <add>, %43, %cst_20 [1, 2] : vector<1x16x8xf32> to vector<1xf32>
    %45 = vector.shape_cast %44 : vector<1xf32> to vector<1x1x1xf32>
    %46 = vector.extract %45[0, 0, 0] : f32 from vector<1x1x1xf32>
    %47 = vector.broadcast %46 : f32 to vector<1x1xf32>
    %cst_21 = arith.constant 1.280000e+02 : f32
    %48 = vector.broadcast %cst_21 : f32 to vector<1x1xf32>
    %49 = arith.divf %47, %48 : vector<1x1xf32>
    %50 = vector.broadcast %39 : vector<1x1xf32> to vector<16x8xf32>
    %51 = arith.subf %32, %50 : vector<16x8xf32>
    %cst_22 = arith.constant 9.99999974E-6 : f32
    %52 = vector.broadcast %cst_22 : f32 to vector<1x1xf32>
    %53 = arith.addf %49, %52 : vector<1x1xf32>
    %54 = math.rsqrt %53 : vector<1x1xf32>
    %55 = vector.broadcast %54 : vector<1x1xf32> to vector<16x8xf32>
    %56 = arith.mulf %51, %55 : vector<16x8xf32>
    %cst_23 = arith.constant dense<0.000000e+00> : vector<2x16xf32>
    %57 = tpu.matmul %0, %56, %cst_23 {dimension_numbers = #tpu.dot_dimension_numbers<[1], [1], [0], [0], [0, 0, 1, 0], [], []>} : vector<2x8xf32>, vector<16x8xf32>, vector<2x16xf32> -> vector<2x16xf32>
    %c0_24 = arith.constant 0 : index
    %c0_25 = arith.constant 0 : index
    %c0_26 = arith.constant 0 : index
    %c0_27 = arith.constant 0 : index
    %58 = vector.load %arg6[%c0_24, %c0_25, %c0_26, %c0_27] : memref<1x1x2x16xf32, #tpu.memory_space<vmem>>, vector<1x1x2x16xf32>
    %59 = vector.shape_cast %58 : vector<1x1x2x16xf32> to vector<2x16xf32>
    %60 = vector.shape_cast %57 : vector<2x16xf32> to vector<1x1x2x16xf32>
    tpu.vector_store %arg6[%c0_24, %c0_25, %c0_26, %c0_27], %60 {strides = array<i32>} : memref<1x1x2x16xf32, #tpu.memory_space<vmem>>, vector<1x1x2x16xf32>,
    return
  }
  func.func @transform_0(%arg0: i32, %arg1: i32) -> (i32, i32, i32, i32) {
    %c0_i32 = arith.constant 0 : i32
    %c0_i32_0 = arith.constant 0 : i32
    %c0_i32_1 = arith.constant 0 : i32
    return %arg0, %arg1, %c0_i32, %c0_i32_0 : i32, i32, i32, i32
  }
  func.func @transform_1(%arg0: i32, %arg1: i32) -> (i32, i32, i32, i32) {
    %c0_i32 = arith.constant 0 : i32
    %c0_i32_0 = arith.constant 0 : i32
    %c0_i32_1 = arith.constant 0 : i32
    return %arg0, %arg1, %c0_i32, %c0_i32_0 : i32, i32, i32, i32
  }
  func.func @transform_2(%arg0: i32, %arg1: i32) -> (i32, i32) {
    %c0_i32 = arith.constant 0 : i32
    %c0_i32_0 = arith.constant 0 : i32
    %c0_i32_1 = arith.constant 0 : i32
    return %c0_i32, %c0_i32_0 : i32, i32
  }
  func.func @transform_3(%arg0: i32, %arg1: i32) -> (i32, i32, i32, i32) {
    %c0_i32 = arith.constant 0 : i32
    %c0_i32_0 = arith.constant 0 : i32
    %c0_i32_1 = arith.constant 0 : i32
    return %arg0, %arg1, %c0_i32, %c0_i32_0 : i32, i32, i32, i32
  }
  func.func @transform_4(%arg0: i32, %arg1: i32) -> (i32, i32, i32, i32) {
    %c0_i32 = arith.constant 0 : i32
    %c0_i32_0 = arith.constant 0 : i32
    %c0_i32_1 = arith.constant 0 : i32
    return %arg0, %arg1, %c0_i32, %c0_i32_0 : i32, i32, i32, i32
  }
}

module attributes {stable_mosaic.version = 11 : i64} {
  func.func @_att_kernel(%arg0: i32, %arg1: i32, %arg2: memref<32xi32, #tpu.memory_space<smem>>, %arg3: memref<32xi32, #tpu.memory_space<smem>>, %arg4: memref<1x1x16x8xf32, #tpu.memory_space<vmem>>, %arg5: memref<1x1x16x8xf32, #tpu.memory_space<vmem>>, %arg6: memref<1x1x16x8xf32, #tpu.memory_space<vmem>>, %arg7: memref<1x1x16x8xf32, #tpu.memory_space<vmem>>) attributes {dimension_semantics = [#tpu.dimension_semantics<parallel>, #tpu.dimension_semantics<parallel>], iteration_bounds = array<i64: 2, 4>, scalar_prefetch = 2 : i64, scratch_operands = 0 : i64, tpu.core_type = #tpu.core_type<tc>, window_params = [{transform_indices = @transform_0, window_bounds = array<i64: 1, 1, 16, 8>}, {transform_indices = @transform_1, window_bounds = array<i64: 1, 1, 16, 8>}, {transform_indices = @transform_2, window_bounds = array<i64: 1, 1, 16, 8>}, {transform_indices = @transform_3, window_bounds = array<i64: 1, 1, 16, 8>}]} {
    %c4_i32 = arith.constant 4 : i32
    %0 = arith.muli %arg0, %c4_i32 : i32
    %1 = arith.addi %0, %arg1 : i32
    %c4_i32_0 = arith.constant 4 : i32
    %2 = arith.muli %1, %c4_i32_0 : i32
    %c0 = arith.constant 0 : index
    %c0_1 = arith.constant 0 : index
    %c0_2 = arith.constant 0 : index
    %c0_3 = arith.constant 0 : index
    %3 = vector.load %arg4[%c0, %c0_1, %c0_2, %c0_3] : memref<1x1x16x8xf32, #tpu.memory_space<vmem>>, vector<1x1x16x8xf32>
    %4 = vector.shape_cast %3 : vector<1x1x16x8xf32> to vector<16x8xf32>
    %5 = vector.shape_cast %4 : vector<16x8xf32> to vector<1x16x8xf32>
    %cst = arith.constant dense<0.000000e+00> : vector<1xf32>
    %6 = vector.multi_reduction <add>, %5, %cst [1, 2] : vector<1x16x8xf32> to vector<1xf32>
    %7 = vector.shape_cast %6 : vector<1xf32> to vector<1x1x1xf32>
    %8 = vector.extract %7[0, 0, 0] : f32 from vector<1x1x1xf32>
    %9 = vector.broadcast %8 : f32 to vector<1x1xf32>
    %cst_4 = arith.constant 1.280000e+02 : f32
    %10 = vector.broadcast %cst_4 : f32 to vector<1x1xf32>
    %11 = arith.divf %9, %10 : vector<1x1xf32>
    %12 = vector.broadcast %11 : vector<1x1xf32> to vector<16x8xf32>
    %13 = arith.subf %4, %12 : vector<16x8xf32>
    %14 = arith.mulf %13, %13 : vector<16x8xf32>
    %15 = vector.shape_cast %14 : vector<16x8xf32> to vector<1x16x8xf32>
    %cst_5 = arith.constant dense<0.000000e+00> : vector<1xf32>
    %16 = vector.multi_reduction <add>, %15, %cst_5 [1, 2] : vector<1x16x8xf32> to vector<1xf32>
    %17 = vector.shape_cast %16 : vector<1xf32> to vector<1x1x1xf32>
    %18 = vector.extract %17[0, 0, 0] : f32 from vector<1x1x1xf32>
    %19 = vector.broadcast %18 : f32 to vector<1x1xf32>
    %cst_6 = arith.constant 1.280000e+02 : f32
    %20 = vector.broadcast %cst_6 : f32 to vector<1x1xf32>
    %21 = arith.divf %19, %20 : vector<1x1xf32>
    %cst_7 = arith.constant 9.99999974E-6 : f32
    %22 = vector.broadcast %cst_7 : f32 to vector<1x1xf32>
    %23 = arith.addf %21, %22 : vector<1x1xf32>
    %24 = math.rsqrt %23 : vector<1x1xf32>
    %c0_8 = arith.constant 0 : index
    %c0_9 = arith.constant 0 : index
    %c0_10 = arith.constant 0 : index
    %c0_11 = arith.constant 0 : index
    %25 = vector.load %arg5[%c0_8, %c0_9, %c0_10, %c0_11] : memref<1x1x16x8xf32, #tpu.memory_space<vmem>>, vector<1x1x16x8xf32>
    %26 = vector.shape_cast %25 : vector<1x1x16x8xf32> to vector<16x8xf32>
    %27 = vector.shape_cast %26 : vector<16x8xf32> to vector<1x16x8xf32>
    %cst_12 = arith.constant dense<0.000000e+00> : vector<1xf32>
    %28 = vector.multi_reduction <add>, %27, %cst_12 [1, 2] : vector<1x16x8xf32> to vector<1xf32>
    %29 = vector.shape_cast %28 : vector<1xf32> to vector<1x1x1xf32>
    %30 = vector.extract %29[0, 0, 0] : f32 from vector<1x1x1xf32>
    %31 = vector.broadcast %30 : f32 to vector<1x1xf32>
    %cst_13 = arith.constant 1.280000e+02 : f32
    %32 = vector.broadcast %cst_13 : f32 to vector<1x1xf32>
    %33 = arith.divf %31, %32 : vector<1x1xf32>
    %34 = vector.broadcast %33 : vector<1x1xf32> to vector<16x8xf32>
    %35 = arith.subf %26, %34 : vector<16x8xf32>
    %36 = arith.mulf %35, %35 : vector<16x8xf32>
    %37 = vector.shape_cast %36 : vector<16x8xf32> to vector<1x16x8xf32>
    %cst_14 = arith.constant dense<0.000000e+00> : vector<1xf32>
    %38 = vector.multi_reduction <add>, %37, %cst_14 [1, 2] : vector<1x16x8xf32> to vector<1xf32>
    %39 = vector.shape_cast %38 : vector<1xf32> to vector<1x1x1xf32>
    %40 = vector.extract %39[0, 0, 0] : f32 from vector<1x1x1xf32>
    %41 = vector.broadcast %40 : f32 to vector<1x1xf32>
    %cst_15 = arith.constant 1.280000e+02 : f32
    %42 = vector.broadcast %cst_15 : f32 to vector<1x1xf32>
    %43 = arith.divf %41, %42 : vector<1x1xf32>
    %cst_16 = arith.constant 9.99999974E-6 : f32
    %44 = vector.broadcast %cst_16 : f32 to vector<1x1xf32>
    %45 = arith.addf %43, %44 : vector<1x1xf32>
    %46 = math.rsqrt %45 : vector<1x1xf32>
    %c0_i32 = arith.constant 0 : i32
    %47 = arith.addi %2, %c0_i32 : i32
    %48 = arith.index_cast %47 : i32 to index
    %49 = memref.load %arg2[%48] : memref<32xi32, #tpu.memory_space<smem>>
    %c0_17 = arith.constant 0 : index
    %c0_18 = arith.constant 0 : index
    %50 = arith.index_cast %49 : i32 to index
    %c0_19 = arith.constant 0 : index
    %51 = vector.load %arg4[%c0_17, %c0_18, %50, %c0_19] : memref<1x1x16x8xf32, #tpu.memory_space<vmem>>, vector<1x1x1x8xf32>
    %52 = vector.shape_cast %51 : vector<1x1x1x8xf32> to vector<1x8xf32>
    %c1_i32 = arith.constant 1 : i32
    %53 = arith.addi %2, %c1_i32 : i32
    %54 = arith.index_cast %53 : i32 to index
    %55 = memref.load %arg2[%54] : memref<32xi32, #tpu.memory_space<smem>>
    %c0_20 = arith.constant 0 : index
    %c0_21 = arith.constant 0 : index
    %56 = arith.index_cast %55 : i32 to index
    %c0_22 = arith.constant 0 : index
    %57 = vector.load %arg4[%c0_20, %c0_21, %56, %c0_22] : memref<1x1x16x8xf32, #tpu.memory_space<vmem>>, vector<1x1x1x8xf32>
    %58 = vector.shape_cast %57 : vector<1x1x1x8xf32> to vector<1x8xf32>
    %c2_i32 = arith.constant 2 : i32
    %59 = arith.addi %2, %c2_i32 : i32
    %60 = arith.index_cast %59 : i32 to index
    %61 = memref.load %arg2[%60] : memref<32xi32, #tpu.memory_space<smem>>
    %c0_23 = arith.constant 0 : index
    %c0_24 = arith.constant 0 : index
    %62 = arith.index_cast %61 : i32 to index
    %c0_25 = arith.constant 0 : index
    %63 = vector.load %arg4[%c0_23, %c0_24, %62, %c0_25] : memref<1x1x16x8xf32, #tpu.memory_space<vmem>>, vector<1x1x1x8xf32>
    %64 = vector.shape_cast %63 : vector<1x1x1x8xf32> to vector<1x8xf32>
    %c3_i32 = arith.constant 3 : i32
    %65 = arith.addi %2, %c3_i32 : i32
    %66 = arith.index_cast %65 : i32 to index
    %67 = memref.load %arg2[%66] : memref<32xi32, #tpu.memory_space<smem>>
    %c0_26 = arith.constant 0 : index
    %c0_27 = arith.constant 0 : index
    %68 = arith.index_cast %67 : i32 to index
    %c0_28 = arith.constant 0 : index
    %69 = vector.load %arg4[%c0_26, %c0_27, %68, %c0_28] : memref<1x1x16x8xf32, #tpu.memory_space<vmem>>, vector<1x1x1x8xf32>
    %70 = vector.shape_cast %69 : vector<1x1x1x8xf32> to vector<1x8xf32>
    %71 = tpu.concatenate %52, %58, %64, %70 in 0 : vector<1x8xf32>, vector<1x8xf32>, vector<1x8xf32>, vector<1x8xf32> -> vector<4x8xf32>
    %c0_i32_29 = arith.constant 0 : i32
    %72 = arith.addi %2, %c0_i32_29 : i32
    %73 = arith.index_cast %72 : i32 to index
    %74 = memref.load %arg3[%73] : memref<32xi32, #tpu.memory_space<smem>>
    %c0_30 = arith.constant 0 : index
    %c0_31 = arith.constant 0 : index
    %75 = arith.index_cast %74 : i32 to index
    %c0_32 = arith.constant 0 : index
    %76 = vector.load %arg5[%c0_30, %c0_31, %75, %c0_32] : memref<1x1x16x8xf32, #tpu.memory_space<vmem>>, vector<1x1x1x8xf32>
    %77 = vector.shape_cast %76 : vector<1x1x1x8xf32> to vector<1x8xf32>
    %c1_i32_33 = arith.constant 1 : i32
    %78 = arith.addi %2, %c1_i32_33 : i32
    %79 = arith.index_cast %78 : i32 to index
    %80 = memref.load %arg3[%79] : memref<32xi32, #tpu.memory_space<smem>>
    %c0_34 = arith.constant 0 : index
    %c0_35 = arith.constant 0 : index
    %81 = arith.index_cast %80 : i32 to index
    %c0_36 = arith.constant 0 : index
    %82 = vector.load %arg5[%c0_34, %c0_35, %81, %c0_36] : memref<1x1x16x8xf32, #tpu.memory_space<vmem>>, vector<1x1x1x8xf32>
    %83 = vector.shape_cast %82 : vector<1x1x1x8xf32> to vector<1x8xf32>
    %c2_i32_37 = arith.constant 2 : i32
    %84 = arith.addi %2, %c2_i32_37 : i32
    %85 = arith.index_cast %84 : i32 to index
    %86 = memref.load %arg3[%85] : memref<32xi32, #tpu.memory_space<smem>>
    %c0_38 = arith.constant 0 : index
    %c0_39 = arith.constant 0 : index
    %87 = arith.index_cast %86 : i32 to index
    %c0_40 = arith.constant 0 : index
    %88 = vector.load %arg5[%c0_38, %c0_39, %87, %c0_40] : memref<1x1x16x8xf32, #tpu.memory_space<vmem>>, vector<1x1x1x8xf32>
    %89 = vector.shape_cast %88 : vector<1x1x1x8xf32> to vector<1x8xf32>
    %c3_i32_41 = arith.constant 3 : i32
    %90 = arith.addi %2, %c3_i32_41 : i32
    %91 = arith.index_cast %90 : i32 to index
    %92 = memref.load %arg3[%91] : memref<32xi32, #tpu.memory_space<smem>>
    %c0_42 = arith.constant 0 : index
    %c0_43 = arith.constant 0 : index
    %93 = arith.index_cast %92 : i32 to index
    %c0_44 = arith.constant 0 : index
    %94 = vector.load %arg5[%c0_42, %c0_43, %93, %c0_44] : memref<1x1x16x8xf32, #tpu.memory_space<vmem>>, vector<1x1x1x8xf32>
    %95 = vector.shape_cast %94 : vector<1x1x1x8xf32> to vector<1x8xf32>
    %96 = tpu.concatenate %77, %83, %89, %95 in 0 : vector<1x8xf32>, vector<1x8xf32>, vector<1x8xf32>, vector<1x8xf32> -> vector<4x8xf32>
    %c0_i32_45 = arith.constant 0 : i32
    %97 = arith.addi %2, %c0_i32_45 : i32
    %98 = arith.index_cast %97 : i32 to index
    %99 = memref.load %arg3[%98] : memref<32xi32, #tpu.memory_space<smem>>
    %c0_46 = arith.constant 0 : index
    %c0_47 = arith.constant 0 : index
    %100 = arith.index_cast %99 : i32 to index
    %c0_48 = arith.constant 0 : index
    %101 = vector.load %arg6[%c0_46, %c0_47, %100, %c0_48] : memref<1x1x16x8xf32, #tpu.memory_space<vmem>>, vector<1x1x1x8xf32>
    %102 = vector.shape_cast %101 : vector<1x1x1x8xf32> to vector<1x8xf32>
    %c1_i32_49 = arith.constant 1 : i32
    %103 = arith.addi %2, %c1_i32_49 : i32
    %104 = arith.index_cast %103 : i32 to index
    %105 = memref.load %arg3[%104] : memref<32xi32, #tpu.memory_space<smem>>
    %c0_50 = arith.constant 0 : index
    %c0_51 = arith.constant 0 : index
    %106 = arith.index_cast %105 : i32 to index
    %c0_52 = arith.constant 0 : index
    %107 = vector.load %arg6[%c0_50, %c0_51, %106, %c0_52] : memref<1x1x16x8xf32, #tpu.memory_space<vmem>>, vector<1x1x1x8xf32>
    %108 = vector.shape_cast %107 : vector<1x1x1x8xf32> to vector<1x8xf32>
    %c2_i32_53 = arith.constant 2 : i32
    %109 = arith.addi %2, %c2_i32_53 : i32
    %110 = arith.index_cast %109 : i32 to index
    %111 = memref.load %arg3[%110] : memref<32xi32, #tpu.memory_space<smem>>
    %c0_54 = arith.constant 0 : index
    %c0_55 = arith.constant 0 : index
    %112 = arith.index_cast %111 : i32 to index
    %c0_56 = arith.constant 0 : index
    %113 = vector.load %arg6[%c0_54, %c0_55, %112, %c0_56] : memref<1x1x16x8xf32, #tpu.memory_space<vmem>>, vector<1x1x1x8xf32>
    %114 = vector.shape_cast %113 : vector<1x1x1x8xf32> to vector<1x8xf32>
    %c3_i32_57 = arith.constant 3 : i32
    %115 = arith.addi %2, %c3_i32_57 : i32
    %116 = arith.index_cast %115 : i32 to index
    %117 = memref.load %arg3[%116] : memref<32xi32, #tpu.memory_space<smem>>
    %c0_58 = arith.constant 0 : index
    %c0_59 = arith.constant 0 : index
    %118 = arith.index_cast %117 : i32 to index
    %c0_60 = arith.constant 0 : index
    %119 = vector.load %arg6[%c0_58, %c0_59, %118, %c0_60] : memref<1x1x16x8xf32, #tpu.memory_space<vmem>>, vector<1x1x1x8xf32>
    %120 = vector.shape_cast %119 : vector<1x1x1x8xf32> to vector<1x8xf32>
    %121 = tpu.concatenate %102, %108, %114, %120 in 0 : vector<1x8xf32>, vector<1x8xf32>, vector<1x8xf32>, vector<1x8xf32> -> vector<4x8xf32>
    %122 = vector.broadcast %11 : vector<1x1xf32> to vector<4x8xf32>
    %123 = arith.subf %71, %122 : vector<4x8xf32>
    %124 = vector.broadcast %24 : vector<1x1xf32> to vector<4x8xf32>
    %125 = arith.mulf %123, %124 : vector<4x8xf32>
    %126 = vector.shape_cast %125 : vector<4x8xf32> to vector<2x2x8xf32>
    %127 = vector.broadcast %33 : vector<1x1xf32> to vector<4x8xf32>
    %128 = arith.subf %96, %127 : vector<4x8xf32>
    %129 = vector.broadcast %46 : vector<1x1xf32> to vector<4x8xf32>
    %130 = arith.mulf %128, %129 : vector<4x8xf32>
    %131 = vector.shape_cast %130 : vector<4x8xf32> to vector<2x2x8xf32>
    %132 = vector.shape_cast %121 : vector<4x8xf32> to vector<2x2x8xf32>
    %cst_61 = arith.constant dense<0.000000e+00> : vector<2x2x2xf32>
    %133 = tpu.matmul %126, %131, %cst_61 {dimension_numbers = #tpu.dot_dimension_numbers<[2], [2], [1], [1], [0, 0, 0, 1, 1, 1], [0], [0]>} : vector<2x2x8xf32>, vector<2x2x8xf32>, vector<2x2x2xf32> -> vector<2x2x2xf32>
    %cst_62 = arith.constant dense<0xFF800000> : vector<2x2xf32>
    %134 = vector.multi_reduction <maximumf>, %133, %cst_62 [2] : vector<2x2x2xf32> to vector<2x2xf32>
    %135 = vector.shape_cast %134 : vector<2x2xf32> to vector<2x2x1xf32>
    %136 = vector.broadcast %135 : vector<2x2x1xf32> to vector<2x2x2xf32>
    %137 = arith.subf %133, %136 : vector<2x2x2xf32>
    %138 = math.exp %137 : vector<2x2x2xf32>
    %cst_63 = arith.constant dense<0.000000e+00> : vector<2x2xf32>
    %139 = vector.multi_reduction <add>, %138, %cst_63 [2] : vector<2x2x2xf32> to vector<2x2xf32>
    %140 = vector.shape_cast %139 : vector<2x2xf32> to vector<2x2x1xf32>
    %141 = vector.broadcast %140 : vector<2x2x1xf32> to vector<2x2x2xf32>
    %142 = arith.divf %138, %141 : vector<2x2x2xf32>
    %cst_64 = arith.constant dense<0.000000e+00> : vector<2x2x8xf32>
    %143 = tpu.matmul %142, %132, %cst_64 {dimension_numbers = #tpu.dot_dimension_numbers<[2], [1], [1], [2], [0, 0, 0, 1, 1, 2], [0], [0]>} : vector<2x2x2xf32>, vector<2x2x8xf32>, vector<2x2x8xf32> -> vector<2x2x8xf32>
    %144 = vector.shape_cast %143 : vector<2x2x8xf32> to vector<4x8xf32>
    %145 = tpu.iota {dimensions = array<i32: 1>} : vector<1x16xi32>
    %c0_i32_65 = arith.constant 0 : i32
    %146 = arith.addi %2, %c0_i32_65 : i32
    %147 = arith.index_cast %146 : i32 to index
    %148 = memref.load %arg3[%147] : memref<32xi32, #tpu.memory_space<smem>>
    %149 = vector.broadcast %148 : i32 to vector<1x16xi32>
    %150 = arith.cmpi eq, %145, %149 : vector<1x16xi32>
    %151 = arith.extui %150 : vector<1x16xi1> to vector<1x16xi32>
    %152 = arith.sitofp %151 : vector<1x16xi32> to vector<1x16xf32>
    %c1_i32_66 = arith.constant 1 : i32
    %153 = arith.addi %2, %c1_i32_66 : i32
    %154 = arith.index_cast %153 : i32 to index
    %155 = memref.load %arg3[%154] : memref<32xi32, #tpu.memory_space<smem>>
    %156 = vector.broadcast %155 : i32 to vector<1x16xi32>
    %157 = arith.cmpi eq, %145, %156 : vector<1x16xi32>
    %158 = arith.extui %157 : vector<1x16xi1> to vector<1x16xi32>
    %159 = arith.sitofp %158 : vector<1x16xi32> to vector<1x16xf32>
    %c2_i32_67 = arith.constant 2 : i32
    %160 = arith.addi %2, %c2_i32_67 : i32
    %161 = arith.index_cast %160 : i32 to index
    %162 = memref.load %arg3[%161] : memref<32xi32, #tpu.memory_space<smem>>
    %163 = vector.broadcast %162 : i32 to vector<1x16xi32>
    %164 = arith.cmpi eq, %145, %163 : vector<1x16xi32>
    %165 = arith.extui %164 : vector<1x16xi1> to vector<1x16xi32>
    %166 = arith.sitofp %165 : vector<1x16xi32> to vector<1x16xf32>
    %c3_i32_68 = arith.constant 3 : i32
    %167 = arith.addi %2, %c3_i32_68 : i32
    %168 = arith.index_cast %167 : i32 to index
    %169 = memref.load %arg3[%168] : memref<32xi32, #tpu.memory_space<smem>>
    %170 = vector.broadcast %169 : i32 to vector<1x16xi32>
    %171 = arith.cmpi eq, %145, %170 : vector<1x16xi32>
    %172 = arith.extui %171 : vector<1x16xi1> to vector<1x16xi32>
    %173 = arith.sitofp %172 : vector<1x16xi32> to vector<1x16xf32>
    %174 = tpu.concatenate %152, %159, %166, %173 in 0 : vector<1x16xf32>, vector<1x16xf32>, vector<1x16xf32>, vector<1x16xf32> -> vector<4x16xf32>
    %cst_69 = arith.constant dense<0.000000e+00> : vector<16x8xf32>
    %175 = tpu.matmul %174, %144, %cst_69 {dimension_numbers = #tpu.dot_dimension_numbers<[0], [0], [1], [1], [0, 1, 1, 1], [], []>} : vector<4x16xf32>, vector<4x8xf32>, vector<16x8xf32> -> vector<16x8xf32>
    %cst_70 = arith.constant 1.000000e+05 : f32
    %176 = vector.broadcast %cst_70 : f32 to vector<16x8xf32>
    %177 = arith.mulf %175, %176 : vector<16x8xf32>
    %c0_71 = arith.constant 0 : index
    %c0_72 = arith.constant 0 : index
    %c0_73 = arith.constant 0 : index
    %c0_74 = arith.constant 0 : index
    %178 = vector.load %arg7[%c0_71, %c0_72, %c0_73, %c0_74] : memref<1x1x16x8xf32, #tpu.memory_space<vmem>>, vector<1x1x16x8xf32>
    %179 = vector.shape_cast %178 : vector<1x1x16x8xf32> to vector<16x8xf32>
    %180 = vector.shape_cast %177 : vector<16x8xf32> to vector<1x1x16x8xf32>
    tpu.vector_store %arg7[%c0_71, %c0_72, %c0_73, %c0_74], %180 {strides = array<i32>} : memref<1x1x16x8xf32, #tpu.memory_space<vmem>>, vector<1x1x16x8xf32>,
    return
  }
  func.func @transform_0(%arg0: i32, %arg1: i32, %arg2: memref<32xi32, #tpu.memory_space<smem>>, %arg3: memref<32xi32, #tpu.memory_space<smem>>) -> (i32, i32, i32, i32) {
    %c0_i32 = arith.constant 0 : i32
    %c0_i32_0 = arith.constant 0 : i32
    %c0_i32_1 = arith.constant 0 : i32
    return %arg0, %arg1, %c0_i32, %c0_i32_0 : i32, i32, i32, i32
  }
  func.func @transform_1(%arg0: i32, %arg1: i32, %arg2: memref<32xi32, #tpu.memory_space<smem>>, %arg3: memref<32xi32, #tpu.memory_space<smem>>) -> (i32, i32, i32, i32) {
    %c0_i32 = arith.constant 0 : i32
    %c0_i32_0 = arith.constant 0 : i32
    %c0_i32_1 = arith.constant 0 : i32
    return %arg0, %arg1, %c0_i32, %c0_i32_0 : i32, i32, i32, i32
  }
  func.func @transform_2(%arg0: i32, %arg1: i32, %arg2: memref<32xi32, #tpu.memory_space<smem>>, %arg3: memref<32xi32, #tpu.memory_space<smem>>) -> (i32, i32, i32, i32) {
    %c0_i32 = arith.constant 0 : i32
    %c0_i32_0 = arith.constant 0 : i32
    %c0_i32_1 = arith.constant 0 : i32
    return %arg0, %arg1, %c0_i32, %c0_i32_0 : i32, i32, i32, i32
  }
  func.func @transform_3(%arg0: i32, %arg1: i32, %arg2: memref<32xi32, #tpu.memory_space<smem>>, %arg3: memref<32xi32, #tpu.memory_space<smem>>) -> (i32, i32, i32, i32) {
    %c0_i32 = arith.constant 0 : i32
    %c0_i32_0 = arith.constant 0 : i32
    %c0_i32_1 = arith.constant 0 : i32
    return %arg0, %arg1, %c0_i32, %c0_i32_0 : i32, i32, i32, i32
  }
}

</mosaic_0001>

<llo_original>
// kernel: kmeans_mha_forward.3
$region0: #{kmeans_mha_forward.3}
  #allocation0 [shape = 'u32[]', space=smem, size = 0x4, offset = 0x4, fixed_abs, tag = 'smem constant byte address 0x4 - core index']
  #allocation1 [shape = 'u32[72,128]{1,0:T(1,128)}', space=vmem, size = 0x9000, scoped, tag = 'internal scratch']
  #allocation2 [shape = 'f32[32,96]{1,0:T(8,128)}', space=vmem, size = 0x4000, scoped, tag = 'scratch operand']
  %s0 = inlined_call_operand.hbm [shape: f32[32,32], index: 0, kind: input, shape index: {}]
  %s1 = inlined_call_operand.hbm [shape: f32[32,96], index: 1, kind: input, shape index: {}]
  %s2 = inlined_call_operand.vmem [shape: f32[1,96], index: 2, kind: input, shape index: {}]
  %s3 = inlined_call_operand.vmem [shape: f32[32,96], index: 3, kind: output, shape index: {}]
  %s4 = sld [smem:[#allocation0]]
  $region38: #{kmeans_mha_forward.3} parent=0
    _
  %s6 = ssub.s32 1, %s4
  %s7 = scalar_select 0, %s6, %s4
  $region1: #{kmeans_mha_forward.3} parent=0
    #allocation3 [shape = 'u8[16384]{0}', space=vmem, size = 0x4000, scoped, tag = 'input window, operand 0, single buffered']
    #allocation4 [shape = 's32[1]{0}', space=sflag, size = 0x4, scoped, tag = 'scoped memory for kmeans_mha_forward.3']
    #allocation5 [shape = 'u8[16384]{0}', space=vmem, size = 0x4000, scoped, tag = 'input window, operand 1, single buffered']
    #allocation6 [shape = 's32[1]{0}', space=sflag, size = 0x4, scoped, tag = 'scoped memory for kmeans_mha_forward.3']
    %8 = vsyncpa [#allocation4], 0
    %9 = vsyncpa [#allocation6], 0
    // Predicated region
    $region2: #{kmeans_mha_forward.3} parent=1 // pred_check
      _
    $region3: #{kmeans_mha_forward.3} parent=1 // pred_check_branch
      %11 = sbr.rel (0) target = $region5
    $region4: #{kmeans_mha_forward.3} parent=1 // pred_region
      %13 = vsyncadd [#allocation4], 0
      %s14 = sshll.u32 %s0, 4
      %s15 = int_to_ptr.hbm [resolvable:$true] %s14
      %s16 = sshll.u32 [#allocation3], 4
      %s17 = int_to_ptr.vmem [resolvable:$true] %s16
      %22 = dma.hbm_to_vmem [thread:$0]  %s15, 512, %s17, [#allocation4], 128, 128, 8
    $region5: #{kmeans_mha_forward.3} parent=1 // pred_fallthru
      _
    // Predicated region
    $region6: #{kmeans_mha_forward.3} parent=1 // pred_check
      _
    $region7: #{kmeans_mha_forward.3} parent=1 // pred_check_branch
      %24 = sbr.rel (0) target = $region9
    $region8: #{kmeans_mha_forward.3} parent=1 // pred_region
      %26 = vsyncadd [#allocation6], 0
      %s27 = sshll.u32 %s1, 4
      %s28 = int_to_ptr.hbm [resolvable:$true] %s27
      %s29 = sshll.u32 [#allocation5], 4
      %s30 = int_to_ptr.vmem [resolvable:$true] %s29
      %35 = dma.hbm_to_vmem [thread:$0]  %s28, 512, %s30, [#allocation6], 128, 128, 8
    $region9: #{kmeans_mha_forward.3} parent=1 // pred_fallthru
      _
    // Predicated region
    $region10: #{kmeans_mha_forward.3} parent=1 // pred_check
      _
    $region11: #{kmeans_mha_forward.3} parent=1 // pred_check_branch
      %37 = sbr.rel (0) target = $region13
    $region12: #{kmeans_mha_forward.3} parent=1 // pred_region
      _
    $region13: #{kmeans_mha_forward.3} parent=1 // pred_fallthru
      _
    // Predicated region
    $region14: #{kmeans_mha_forward.3} parent=1 // pred_check
      _
    $region15: #{kmeans_mha_forward.3} parent=1 // pred_check_branch
      %39 = sbr.rel (0) target = $region17
    $region16: #{kmeans_mha_forward.3} parent=1 // pred_region
      %41 = dma.done [#allocation4], 512
    $region17: #{kmeans_mha_forward.3} parent=1 // pred_fallthru
      _
    // Predicated region
    $region18: #{kmeans_mha_forward.3} parent=1 // pred_check
      _
    $region19: #{kmeans_mha_forward.3} parent=1 // pred_check_branch
      %43 = sbr.rel (0) target = $region21
    $region20: #{kmeans_mha_forward.3} parent=1 // pred_region
      %45 = dma.done [#allocation6], 512
    $region21: #{kmeans_mha_forward.3} parent=1 // pred_fallthru
      _
    %p46 = scmp.eq.s32.totalorder 0, 0
    // Predicated region
    $region22: #{kmeans_mha_forward.3} parent=1 // pred_check
      %p47 = pneg %p46
    $region23: #{kmeans_mha_forward.3} parent=1 // pred_check_branch
      %49 = sbr.rel (%p47) target = $region25
    $region24: #{kmeans_mha_forward.3} parent=1 // pred_region
      %vm50 = vcmask 785408
      %51 = vst.msk [vmem:[#allocation2] sm:$0xff] %vm50, 0.0
      %52 = vst.msk [vmem:[#allocation2 + $0x8] sm:$0xff] %vm50, 0.0
      %53 = vst.msk [vmem:[#allocation2 + $0x10] sm:$0xff] %vm50, 0.0
      %54 = vst.msk [vmem:[#allocation2 + $0x18] sm:$0xff] %vm50, 0.0
    $region25: #{kmeans_mha_forward.3} parent=1 // pred_fallthru
      _
    %v55 = vld [vmem:[#allocation2] sm:$0xff]
    %v56 = vld [vmem:[#allocation2 + $0x8] sm:$0xff]
    %v57 = vld [vmem:[#allocation2 + $0x10] sm:$0xff]
    %v58 = vld [vmem:[#allocation2 + $0x18] sm:$0xff]
    %v59 = vld [vmem:[#allocation3] sm:$0xff]
    %v60 = vld [vmem:[#allocation3 + $0x8] sm:$0xff]
    %v61 = vld [vmem:[#allocation3 + $0x10] sm:$0xff]
    %v62 = vld [vmem:[#allocation3 + $0x18] sm:$0xff]
    %v63 = vld [vmem:[#allocation5] sm:$0xff]
    %v64 = vld [vmem:[#allocation5 + $0x8] sm:$0xff]
    %v65 = vld [vmem:[#allocation5 + $0x10] sm:$0xff]
    %v66 = vld [vmem:[#allocation5 + $0x18] sm:$0xff]
    %vm67 = vcmask 261120
    %v69 = vsel %vm67, %v59, 0
    %v72 = vsel %vm67, %v60, 0
    %v75 = vsel %vm67, %v61, 0
    %v78 = vsel %vm67, %v62, 0
    %80 = vmatpush.msra.mxu0 0.0
    %81 = vmatpush.msra.mxu0 0.0
    %82 = vmatpush.msra.mxu0 0.0
    %83 = vmatpush.msra.mxu0 0.0
    %84 = vmatpush.msra.mxu0 0.0
    %85 = vmatpush.msra.mxu0 0.0
    %86 = vmatpush.msra.mxu0 0.0
    %87 = vmatpush.msra.mxu0 0.0
    %88 = vmatpush.msra.mxu0 0.0
    %89 = vmatpush.msra.mxu0 0.0
    %90 = vmatpush.msra.mxu0 0.0
    %91 = vmatpush.msra.mxu0 0.0
    %92 = vmatpush.msra.mxu0 %v66
    %93 = vmatpush.msra.mxu0 %v65
    %94 = vmatpush.msra.mxu0 %v64
    %95 = vmatpush.msra.mxu0 %v63
    %96 = vmatmul.f32.gmra.mxu0 %v69
    %v97 = vpop.f32.mrf.mxu0
    %v98 = vadd.f32 0.0, %v97
    %99 = vmatmul.f32.gmra.mxu0 %v72
    %v100 = vpop.f32.mrf.mxu0
    %v101 = vadd.f32 0.0, %v100
    %102 = vmatmul.f32.gmra.mxu0 %v75
    %v103 = vpop.f32.mrf.mxu0
    %v104 = vadd.f32 0.0, %v103
    %105 = vmatmul.f32.gmra.mxu0 %v78
    %v106 = vpop.f32.mrf.mxu0
    %v107 = vadd.f32 0.0, %v106
    %108 = vdwg.mxu0
    %v109 = vadd.f32 %v55, %v98
    %v110 = vadd.f32 %v56, %v101
    %v111 = vadd.f32 %v57, %v104
    %v112 = vadd.f32 %v58, %v107
    %vm113 = vcmask 785408
    %114 = vst.msk [vmem:[#allocation2] sm:$0xff] %vm113, %v109
    %115 = vst.msk [vmem:[#allocation2 + $0x8] sm:$0xff] %vm113, %v110
    %116 = vst.msk [vmem:[#allocation2 + $0x10] sm:$0xff] %vm113, %v111
    %117 = vst.msk [vmem:[#allocation2 + $0x18] sm:$0xff] %vm113, %v112
    // Predicated region
    $region26: #{kmeans_mha_forward.3} parent=1 // pred_check
      %p118 = pneg %p46
    $region27: #{kmeans_mha_forward.3} parent=1 // pred_check_branch
      %120 = sbr.rel (%p118) target = $region29
    $region28: #{kmeans_mha_forward.3} parent=1 // pred_region
      %v121 = vld [vmem:[#allocation2] sm:$0xff]
      %v122 = vld [vmem:[#allocation2 + $0x8] sm:$0xff]
      %v123 = vld [vmem:[#allocation2 + $0x10] sm:$0xff]
      %v124 = vld [vmem:[#allocation2 + $0x18] sm:$0xff]
      %v125 = vld [vmem:[%s2] sm:$0x1]
      %v127 = vperm.slane %v125, 0
      %v129 = vadd.f32 %v121, %v127
      %v130 = vadd.f32 %v122, %v127
      %v131 = vadd.f32 %v123, %v127
      %v132 = vadd.f32 %v124, %v127
      %133 = vst.msk [vmem:[%s3] sm:$0xff] %vm113, %v129
      %134 = vst.msk [vmem:[%s3 + $0x8] sm:$0xff] %vm113, %v130
      %135 = vst.msk [vmem:[%s3 + $0x10] sm:$0xff] %vm113, %v131
      %136 = vst.msk [vmem:[%s3 + $0x18] sm:$0xff] %vm113, %v132
    $region29: #{kmeans_mha_forward.3} parent=1 // pred_fallthru
      _
    // Predicated region
    $region30: #{kmeans_mha_forward.3} parent=1 // pred_check
      _
    $region31: #{kmeans_mha_forward.3} parent=1 // pred_check_branch
      %138 = sbr.rel (0) target = $region33
    $region32: #{kmeans_mha_forward.3} parent=1 // pred_region
      _
    $region33: #{kmeans_mha_forward.3} parent=1 // pred_fallthru
      _
    // Predicated region
    $region34: #{kmeans_mha_forward.3} parent=1 // pred_check
      _
    $region35: #{kmeans_mha_forward.3} parent=1 // pred_check_branch
      %140 = sbr.rel (0) target = $region37
    $region36: #{kmeans_mha_forward.3} parent=1 // pred_region
      _
    $region37: #{kmeans_mha_forward.3} parent=1 // pred_fallthru
      _
    %141 = vsyncpa [#allocation4], 1
    %142 = vsyncpa [#allocation6], 1

// kernel: kmeans_mha_forward.4
$region0: #{kmeans_mha_forward.4}
  #allocation0 [shape = 'u32[]', space=smem, size = 0x4, offset = 0x4, fixed_abs, tag = 'smem constant byte address 0x4 - core index']
  #allocation1 [shape = 'u32[72,128]{1,0:T(1,128)}', space=vmem, size = 0x9000, scoped, tag = 'internal scratch']
  %s0 = inlined_call_operand.vmem [shape: f32[2,4,16,8], index: 0, kind: input, shape index: {}]
  %s1 = inlined_call_operand.vmem [shape: f32[2,4,16,8], index: 1, kind: input, shape index: {}]
  %s2 = inlined_call_operand.vmem [shape: f32[2,8], index: 2, kind: input, shape index: {}]
  %s3 = inlined_call_operand.vmem [shape: f32[2,4,2,16], index: 3, kind: output, shape index: {0}]
  %s4 = inlined_call_operand.vmem [shape: f32[2,4,2,16], index: 4, kind: output, shape index: {1}]
  %5 = xla_tuple %s3, %s4
  %s6 = sld [smem:[#allocation0]]
  $region53: #{kmeans_mha_forward.4} parent=0
    _
  %s8 = ssub.s32 1, %s6
  %s9 = scalar_select 0, %s8, %s6
  loop: start=0, step=1, limit=10
  $region2: #{kmeans_mha_forward.4} parent=0 // loop_pre_header
    _
  $region3: #{kmeans_mha_forward.4} parent=0 // loop_header
    %s11 = sphi 0, %s15
    %p12 = scmp.ge.s32.totalorder %s11, 10
    %s18 = sphi 0, %s30
    %s19 = sphi 0, %s26
    %s20 = sphi 0, %s18
    %s21 = sphi 0, %s19
    %s22 = sphi 0, %s20
    %s23 = sphi 0, %s21
    %s35 = sphi 0, %s37
    %s38 = sphi 0, %s35
    %s39 = sphi 0, %s38
    %s55 = sphi 0, %s39
    %s63 = sphi 0, %s65
    %s66 = sphi 0, %s63
    %s67 = sphi 0, %s66
    %s83 = sphi 0, %s67
    %s87 = sphi 0, %s87
    %s89 = sphi 0, %s87
    %s90 = sphi 0, %s89
    %s104 = sphi 0, %s90
    %s112 = sphi 0, %s114
    %s115 = sphi 0, %s112
    %s116 = sphi 0, %s115
    %s132 = sphi 0, %s116
    %s140 = sphi 0, %s142
    %s143 = sphi 0, %s140
    %s144 = sphi 0, %s143
    %s160 = sphi 0, %s144
  $region4: #{kmeans_mha_forward.4} parent=0 // loop_header_branch
    %14 = sbr.rel (%p12) target = $region8
  $region5: #{kmeans_mha_forward.4} parent=0 // loop_body
    %s16 = ssub.s32 %s11, 1
    %s17 = ssub.s32 %s11, 2
    %s24 = sadd.s32 1, %s19
    %p25 = scmp.ge.s32.totalorder %s24, 4
    %s26 = scalar_select %p25, 0, %s24
    %s27 = sadd.s32 1, %s18
    %s28 = scalar_select %p25, %s27, %s18
    %p29 = scmp.ge.s32.totalorder %s28, 2
    %s30 = scalar_select %p29, 0, %s28
    %s31 = ssub.s32 %s18, %s30
    %s32 = ssub.s32 %s19, %s26
    %s33 = sor.u32 %s31, %s32
    %p34 = scmp.eq.s32.totalorder %s33, 0
    %s36 = sadd.s32 %s35, 1
    %s37 = scalar_select %p34, %s35, %s36
    %p40 = pneg %p34
    %p41 = scmp.eq.s32.totalorder %s11, 7
    %p42 = por %p40, %p41
    %p43 = scmp.ne.s32.totalorder %s35, %s38
    %p44 = scmp.eq.s32.totalorder %s11, 0
    %p45 = por %p43, %p44
    %p46 = scmp.ne.s32.totalorder %s35, %s38
    %p47 = scmp.eq.s32.totalorder %s16, 7
    %p48 = por %p46, %p47
    %p49 = scmp.ne.s32.totalorder %s38, %s39
    %p50 = scmp.eq.s32.totalorder %s16, 0
    %p51 = por %p49, %p50
    %p52 = scmp.ne.s32.totalorder %s38, %s39
    %p53 = scmp.eq.s32.totalorder %s17, 7
    %p54 = por %p52, %p53
    %p56 = scmp.ne.s32.totalorder %s39, %s55
    %p57 = scmp.eq.s32.totalorder %s17, 0
    %p58 = por %p56, %p57
    %s59 = ssub.s32 %s18, %s30
    %s60 = ssub.s32 %s19, %s26
    %s61 = sor.u32 %s59, %s60
    %p62 = scmp.eq.s32.totalorder %s61, 0
    %s64 = sadd.s32 %s63, 1
    %s65 = scalar_select %p62, %s63, %s64
    %p68 = pneg %p62
    %p69 = scmp.eq.s32.totalorder %s11, 7
    %p70 = por %p68, %p69
    %p71 = scmp.ne.s32.totalorder %s63, %s66
    %p72 = scmp.eq.s32.totalorder %s11, 0
    %p73 = por %p71, %p72
    %p74 = scmp.ne.s32.totalorder %s63, %s66
    %p75 = scmp.eq.s32.totalorder %s16, 7
    %p76 = por %p74, %p75
    %p77 = scmp.ne.s32.totalorder %s66, %s67
    %p78 = scmp.eq.s32.totalorder %s16, 0
    %p79 = por %p77, %p78
    %p80 = scmp.ne.s32.totalorder %s66, %s67
    %p81 = scmp.eq.s32.totalorder %s17, 7
    %p82 = por %p80, %p81
    %p84 = scmp.ne.s32.totalorder %s67, %s83
    %p85 = scmp.eq.s32.totalorder %s17, 0
    %p86 = por %p84, %p85
    %s88 = sadd.s32 %s87, 1
    %p91 = scmp.eq.s32.totalorder %s11, 7
    %p92 = scmp.ne.s32.totalorder %s87, %s89
    %p93 = scmp.eq.s32.totalorder %s11, 0
    %p94 = por %p92, %p93
    %p95 = scmp.ne.s32.totalorder %s87, %s89
    %p96 = scmp.eq.s32.totalorder %s16, 7
    %p97 = por %p95, %p96
    %p98 = scmp.ne.s32.totalorder %s89, %s90
    %p99 = scmp.eq.s32.totalorder %s16, 0
    %p100 = por %p98, %p99
    %p101 = scmp.ne.s32.totalorder %s89, %s90
    %p102 = scmp.eq.s32.totalorder %s17, 7
    %p103 = por %p101, %p102
    %p105 = scmp.ne.s32.totalorder %s90, %s104
    %p106 = scmp.eq.s32.totalorder %s17, 0
    %p107 = por %p105, %p106
    %s108 = ssub.s32 %s18, %s30
    %s109 = ssub.s32 %s19, %s26
    %s110 = sor.u32 %s108, %s109
    %p111 = scmp.eq.s32.totalorder %s110, 0
    %s113 = sadd.s32 %s112, 1
    %s114 = scalar_select %p111, %s112, %s113
    %p117 = pneg %p111
    %p118 = scmp.eq.s32.totalorder %s11, 7
    %p119 = por %p117, %p118
    %p120 = scmp.ne.s32.totalorder %s112, %s115
    %p121 = scmp.eq.s32.totalorder %s11, 0
    %p122 = por %p120, %p121
    %p123 = scmp.ne.s32.totalorder %s112, %s115
    %p124 = scmp.eq.s32.totalorder %s16, 7
    %p125 = por %p123, %p124
    %p126 = scmp.ne.s32.totalorder %s115, %s116
    %p127 = scmp.eq.s32.totalorder %s16, 0
    %p128 = por %p126, %p127
    %p129 = scmp.ne.s32.totalorder %s115, %s116
    %p130 = scmp.eq.s32.totalorder %s17, 7
    %p131 = por %p129, %p130
    %p133 = scmp.ne.s32.totalorder %s116, %s132
    %p134 = scmp.eq.s32.totalorder %s17, 0
    %p135 = por %p133, %p134
    %s136 = ssub.s32 %s18, %s30
    %s137 = ssub.s32 %s19, %s26
    %s138 = sor.u32 %s136, %s137
    %p139 = scmp.eq.s32.totalorder %s138, 0
    %s141 = sadd.s32 %s140, 1
    %s142 = scalar_select %p139, %s140, %s141
    %p145 = pneg %p139
    %p146 = scmp.eq.s32.totalorder %s11, 7
    %p147 = por %p145, %p146
    %p148 = scmp.ne.s32.totalorder %s140, %s143
    %p149 = scmp.eq.s32.totalorder %s11, 0
    %p150 = por %p148, %p149
    %p151 = scmp.ne.s32.totalorder %s140, %s143
    %p152 = scmp.eq.s32.totalorder %s16, 7
    %p153 = por %p151, %p152
    %p154 = scmp.ne.s32.totalorder %s143, %s144
    %p155 = scmp.eq.s32.totalorder %s16, 0
    %p156 = por %p154, %p155
    %p157 = scmp.ne.s32.totalorder %s143, %s144
    %p158 = scmp.eq.s32.totalorder %s17, 7
    %p159 = por %p157, %p158
    %p161 = scmp.ne.s32.totalorder %s144, %s160
    %p162 = scmp.eq.s32.totalorder %s17, 0
    %p163 = por %p161, %p162
    %p164 = scmp.le.s32.totalorder 1, %s11
    %p165 = scmp.lt.s32.totalorder %s11, 9
    %p166 = pnand %p164, %p165
    %p167 = pneg %p166
    // Predicated region
    $region9: #{kmeans_mha_forward.4} parent=5 // pred_check
      _
    $region10: #{kmeans_mha_forward.4} parent=5 // pred_check_branch
      %169 = sbr.rel (%p166) target = $region12
    $region11: #{kmeans_mha_forward.4} parent=5 // pred_region
      %s170 = ssub.s32 %s11, 1
      // Predicated region
      $region13: #{kmeans_mha_forward.4} parent=11 // pred_check
        %p171 = pneg %p100
      $region14: #{kmeans_mha_forward.4} parent=11 // pred_check_branch
        %173 = sbr.rel (%p171) target = $region16
      $region15: #{kmeans_mha_forward.4} parent=11 // pred_region
        _
      $region16: #{kmeans_mha_forward.4} parent=11 // pred_fallthru
        _
    $region12: #{kmeans_mha_forward.4} parent=5 // pred_fallthru
      _
    %p174 = scmp.lt.s32.totalorder %s11, 8
    // Predicated region
    $region17: #{kmeans_mha_forward.4} parent=5 // pred_check
      %p175 = pneg %p174
    $region18: #{kmeans_mha_forward.4} parent=5 // pred_check_branch
      %177 = sbr.rel (%p175) target = $region20
    $region19: #{kmeans_mha_forward.4} parent=5 // pred_region
      // Predicated region
      $region21: #{kmeans_mha_forward.4} parent=19 // pred_check
        %p178 = pneg %p45
      $region22: #{kmeans_mha_forward.4} parent=19 // pred_check_branch
        %180 = sbr.rel (%p178) target = $region24
      $region23: #{kmeans_mha_forward.4} parent=19 // pred_region
        %p181 = scmp.lt.s32.totalorder %s18, 1
        %s182 = scalar_select %p181, %s18, 1
        %p183 = scmp.lt.s32.totalorder %s19, 3
        %s184 = scalar_select %p183, %s19, 3
        %s185 = smul.addr %s184, 2
        %s186 = smul.addr %s182, 8
        %s187 = sadd.s32 %s185, %s186
        %s188 = smul.addr %s187, 8
        %s189 = scalar_lea.vmem %s0, %s188
      $region24: #{kmeans_mha_forward.4} parent=19 // pred_fallthru
        _
      // Predicated region
      $region25: #{kmeans_mha_forward.4} parent=19 // pred_check
        %p190 = pneg %p73
      $region26: #{kmeans_mha_forward.4} parent=19 // pred_check_branch
        %192 = sbr.rel (%p190) target = $region28
      $region27: #{kmeans_mha_forward.4} parent=19 // pred_region
        %p193 = scmp.lt.s32.totalorder %s18, 1
        %s194 = scalar_select %p193, %s18, 1
        %p195 = scmp.lt.s32.totalorder %s19, 3
        %s196 = scalar_select %p195, %s19, 3
        %s197 = smul.addr %s196, 2
        %s198 = smul.addr %s194, 8
        %s199 = sadd.s32 %s197, %s198
        %s200 = smul.addr %s199, 8
        %s201 = scalar_lea.vmem %s1, %s200
      $region28: #{kmeans_mha_forward.4} parent=19 // pred_fallthru
        _
    $region20: #{kmeans_mha_forward.4} parent=5 // pred_fallthru
      _
    %p202 = scmp.le.s32.totalorder 1, %s11
    %p203 = scmp.lt.s32.totalorder %s11, 9
    %p204 = pnand %p202, %p203
    %p205 = pneg %p204
    // Predicated region
    $region29: #{kmeans_mha_forward.4} parent=5 // pred_check
      _
    $region30: #{kmeans_mha_forward.4} parent=5 // pred_check_branch
      %207 = sbr.rel (%p204) target = $region32
    $region31: #{kmeans_mha_forward.4} parent=5 // pred_region
      %s208 = ssub.s32 %s11, 1
      %p209 = scmp.lt.s32.totalorder %s20, 1
      %s210 = scalar_select %p209, %s20, 1
      %p211 = scmp.lt.s32.totalorder %s21, 3
      %s212 = scalar_select %p211, %s21, 3
      %s213 = smul.addr %s212, 2
      %s214 = smul.addr %s210, 8
      %s215 = sadd.s32 %s213, %s214
      %s216 = smul.addr %s215, 8
      %s217 = scalar_lea.vmem %s0, %s216
      %p218 = pneg %p51
      %p219 = pneg %p48
      %p220 = scmp.lt.s32.totalorder %s20, 1
      %s221 = scalar_select %p220, %s20, 1
      %p222 = scmp.lt.s32.totalorder %s21, 3
      %s223 = scalar_select %p222, %s21, 3
      %s224 = smul.addr %s223, 2
      %s225 = smul.addr %s221, 8
      %s226 = sadd.s32 %s224, %s225
      %s227 = smul.addr %s226, 8
      %s228 = scalar_lea.vmem %s1, %s227
      %p229 = pneg %p79
      %p230 = pneg %p76
      %p231 = pneg %p100
      %p232 = pneg %p97
      %p233 = pneg %p128
      %p234 = pneg %p125
      %p235 = scmp.lt.s32.totalorder %s20, 1
      %s236 = scalar_select %p235, %s20, 1
      %p237 = scmp.lt.s32.totalorder %s21, 3
      %s238 = scalar_select %p237, %s21, 3
      %s239 = smul.addr %s236, 4
      %s240 = sadd.s32 %s238, %s239
      %s241 = smul.addr %s240, 2
      %s242 = scalar_lea.vmem %s3, %s241
      %p243 = pneg %p156
      %p244 = pneg %p153
      %p245 = scmp.lt.s32.totalorder %s20, 1
      %s246 = scalar_select %p245, %s20, 1
      %p247 = scmp.lt.s32.totalorder %s21, 3
      %s248 = scalar_select %p247, %s21, 3
      %s249 = smul.addr %s246, 4
      %s250 = sadd.s32 %s248, %s249
      %s251 = smul.addr %s250, 2
      %s252 = scalar_lea.vmem %s4, %s251
      %p253 = scmp.lt.s32.totalorder %s20, 1
      %s254 = scalar_select %p253, %s20, 1
      %p255 = scmp.lt.s32.totalorder %s21, 3
      %s256 = scalar_select %p255, %s21, 3
      %s257 = smul.addr %s256, 2
      %s258 = smul.addr %s254, 8
      %s259 = sadd.s32 %s257, %s258
      %s260 = smul.addr %s259, 8
      %s261 = scalar_lea.vmem %s0, %s260
      %p262 = scmp.lt.s32.totalorder %s20, 1
      %s263 = scalar_select %p262, %s20, 1
      %p264 = scmp.lt.s32.totalorder %s21, 3
      %s265 = scalar_select %p264, %s21, 3
      %s266 = smul.addr %s265, 2
      %s267 = smul.addr %s263, 8
      %s268 = sadd.s32 %s266, %s267
      %s269 = smul.addr %s268, 8
      %s270 = scalar_lea.vmem %s1, %s269
      %p271 = scmp.lt.s32.totalorder %s20, 1
      %s272 = scalar_select %p271, %s20, 1
      %p273 = scmp.lt.s32.totalorder %s21, 3
      %s274 = scalar_select %p273, %s21, 3
      %s275 = smul.addr %s272, 4
      %s276 = sadd.s32 %s274, %s275
      %s277 = smul.addr %s276, 2
      %s278 = scalar_lea.vmem %s3, %s277
      %p279 = scmp.lt.s32.totalorder %s20, 1
      %s280 = scalar_select %p279, %s20, 1
      %p281 = scmp.lt.s32.totalorder %s21, 3
      %s282 = scalar_select %p281, %s21, 3
      %s283 = smul.addr %s280, 4
      %s284 = sadd.s32 %s282, %s283
      %s285 = smul.addr %s284, 2
      %s286 = scalar_lea.vmem %s4, %s285
      %v287 = vld [vmem:[%s2] sm:$0x3]
      %v288 = vld [vmem:[%s261] sm:$0xff]
      %v289 = vld [vmem:[%s261 + $0x8] sm:$0xff]
      %vm290 = vcmask 64512
      %v291 = vsel %vm290, %v288, 0.0
      %v292 = vsel %vm290, %v289, 0.0
      %v293 = vadd.f32 %v291, %v292
      %294 = vadd.xlane.f32.xlu0 %v293
      %v295 = vpop.xlane.xlu0 %294
      %v296 = vrot.slane %v295, 4
      %v297 = vadd.f32 %v295, %v296
      %v298 = vrot.slane %v297, 2
      %v299 = vadd.f32 %v297, %v298
      %v300 = vrot.slane %v299, 1
      %v301 = vadd.f32 %v299, %v300
      %s302 = vtos %v301
      %v303 = vstv %s302
      %v304 = vrcp.pop 128.0
      %v305 = vmul.f32 128.0, %v304
      %v306 = vsub.f32 1.0, %v305
      %v307 = vmul.f32 %v304, %v306
      %v308 = vadd.f32 %v304, %v307
      %vm309 = vweird.f32 %v304
      %v310 = vsel %vm309, %v304, %v308
      %v311 = vmul.f32 %v303, %v310
      %v312 = vsub.f32 %v288, %v311
      %v313 = vsub.f32 %v289, %v311
      %v314 = vmul.f32 %v312, %v312
      %v315 = vmul.f32 %v313, %v313
      %v316 = vsel %vm290, %v314, 0.0
      %v317 = vsel %vm290, %v315, 0.0
      %v318 = vadd.f32 %v316, %v317
      %319 = vadd.xlane.f32.xlu0 %v318
      %v320 = vpop.xlane.xlu0 %319
      %v321 = vrot.slane %v320, 4
      %v322 = vadd.f32 %v320, %v321
      %v323 = vrot.slane %v322, 2
      %v324 = vadd.f32 %v322, %v323
      %v325 = vrot.slane %v324, 1
      %v326 = vadd.f32 %v324, %v325
      %s327 = vtos %v326
      %v328 = vstv %s327
      %v329 = vmul.f32 %v328, %v310
      %v330 = vadd.f32 %v329, 1e-05
      %v331 = vrsqrt.pop %v330
      %v332 = vmul.f32 %v331, %v330
      %v333 = vmul.f32 %v332, %v331
      %v334 = vmul.f32 0.5, %v333
      %v335 = vsub.f32 1.5, %v334
      %v336 = vmul.f32 %v331, %v335
      %vm337 = vweird.f32 %v330
      %vm338 = vweird.f32 %v331
      %vm339 = vmor %vm337, %vm338
      %v340 = vsel %vm339, %v331, %v336
      %v341 = vmul.f32 %v312, %v340
      %v342 = vmul.f32 %v313, %v340
      %v344 = vsel %vm290, %v287, 0
      %v347 = vsel %vm290, %v341, 0
      %v350 = vsel %vm290, %v342, 0
      %352 = vmatpush.xpose.msra.mxu0 0.0
      %353 = vmatpush.xpose.msra.mxu0 0.0
      %354 = vmatpush.xpose.msra.mxu0 0.0
      %355 = vmatpush.xpose.msra.mxu0 0.0
      %356 = vmatpush.xpose.msra.mxu0 0.0
      %357 = vmatpush.xpose.msra.mxu0 0.0
      %358 = vmatpush.xpose.msra.mxu0 0.0
      %359 = vmatpush.xpose.msra.mxu0 0.0
      %360 = vmatpush.xpose.msra.mxu0 0.0
      %361 = vmatpush.xpose.msra.mxu0 0.0
      %362 = vmatpush.xpose.msra.mxu0 0.0
      %363 = vmatpush.xpose.msra.mxu0 0.0
      %364 = vmatpush.xpose.msra.mxu0 0.0
      %365 = vmatpush.xpose.msra.mxu0 0.0
      %366 = vmatpush.xpose.msra.mxu0 %v350
      %367 = vmatpush.xpose.msra.mxu0 %v347
      %368 = vmatmul.f32.gmra.mxu0 %v344
      %v369 = vpop.f32.mrf.mxu0
      %v370 = vadd.f32 0.0, %v369
      %371 = vdwg.mxu0
      %vm372 = vcmask 123904
      %373 = vst.msk [vmem:[%s278] sm:$0x3] %vm372, %v370
      %v374 = vld [vmem:[%s270] sm:$0xff]
      %v375 = vld [vmem:[%s270 + $0x8] sm:$0xff]
      %v376 = vsel %vm290, %v374, 0.0
      %v377 = vsel %vm290, %v375, 0.0
      %v378 = vadd.f32 %v376, %v377
      %379 = vadd.xlane.f32.xlu0 %v378
      %v380 = vpop.xlane.xlu0 %379
      %v381 = vrot.slane %v380, 4
      %v382 = vadd.f32 %v380, %v381
      %v383 = vrot.slane %v382, 2
      %v384 = vadd.f32 %v382, %v383
      %v385 = vrot.slane %v384, 1
      %v386 = vadd.f32 %v384, %v385
      %s387 = vtos %v386
      %v388 = vstv %s387
      %v389 = vmul.f32 %v388, %v310
      %v390 = vsub.f32 %v374, %v389
      %v391 = vsub.f32 %v375, %v389
      %v392 = vmul.f32 %v390, %v390
      %v393 = vmul.f32 %v391, %v391
      %v394 = vsel %vm290, %v392, 0.0
      %v395 = vsel %vm290, %v393, 0.0
      %v396 = vadd.f32 %v394, %v395
      %397 = vadd.xlane.f32.xlu0 %v396
      %v398 = vpop.xlane.xlu0 %397
      %v399 = vrot.slane %v398, 4
      %v400 = vadd.f32 %v398, %v399
      %v401 = vrot.slane %v400, 2
      %v402 = vadd.f32 %v400, %v401
      %v403 = vrot.slane %v402, 1
      %v404 = vadd.f32 %v402, %v403
      %s405 = vtos %v404
      %v406 = vstv %s405
      %v407 = vmul.f32 %v406, %v310
      %v408 = vadd.f32 %v407, 1e-05
      %v409 = vrsqrt.pop %v408
      %v410 = vmul.f32 %v409, %v408
      %v411 = vmul.f32 %v410, %v409
      %v412 = vmul.f32 0.5, %v411
      %v413 = vsub.f32 1.5, %v412
      %v414 = vmul.f32 %v409, %v413
      %vm415 = vweird.f32 %v408
      %vm416 = vweird.f32 %v409
      %vm417 = vmor %vm415, %vm416
      %v418 = vsel %vm417, %v409, %v414
      %v419 = vmul.f32 %v390, %v418
      %v420 = vmul.f32 %v391, %v418
      %v422 = vsel %vm290, %v419, 0
      %v425 = vsel %vm290, %v420, 0
      %427 = vmatpush.xpose.msra.mxu0 0.0
      %428 = vmatpush.xpose.msra.mxu0 0.0
      %429 = vmatpush.xpose.msra.mxu0 0.0
      %430 = vmatpush.xpose.msra.mxu0 0.0
      %431 = vmatpush.xpose.msra.mxu0 0.0
      %432 = vmatpush.xpose.msra.mxu0 0.0
      %433 = vmatpush.xpose.msra.mxu0 0.0
      %434 = vmatpush.xpose.msra.mxu0 0.0
      %435 = vmatpush.xpose.msra.mxu0 0.0
      %436 = vmatpush.xpose.msra.mxu0 0.0
      %437 = vmatpush.xpose.msra.mxu0 0.0
      %438 = vmatpush.xpose.msra.mxu0 0.0
      %439 = vmatpush.xpose.msra.mxu0 0.0
      %440 = vmatpush.xpose.msra.mxu0 0.0
      %441 = vmatpush.xpose.msra.mxu0 %v425
      %442 = vmatpush.xpose.msra.mxu0 %v422
      %443 = vmatmul.f32.gmra.mxu0 %v344
      %v444 = vpop.f32.mrf.mxu0
      %v445 = vadd.f32 0.0, %v444
      %446 = vdwg.mxu0
      %447 = vst.msk [vmem:[%s286] sm:$0x3] %vm372, %v445
      %p448 = scmp.lt.s32.totalorder %s20, 1
      %s449 = scalar_select %p448, %s20, 1
      %p450 = scmp.lt.s32.totalorder %s21, 3
      %s451 = scalar_select %p450, %s21, 3
      %s452 = smul.addr %s449, 4
      %s453 = sadd.s32 %s451, %s452
      %s454 = smul.addr %s453, 2
      %s455 = scalar_lea.vmem %s3, %s454
      %p456 = scmp.lt.s32.totalorder %s20, 1
      %s457 = scalar_select %p456, %s20, 1
      %p458 = scmp.lt.s32.totalorder %s21, 3
      %s459 = scalar_select %p458, %s21, 3
      %s460 = smul.addr %s457, 4
      %s461 = sadd.s32 %s459, %s460
      %s462 = smul.addr %s461, 2
      %s463 = scalar_lea.vmem %s4, %s462
      // Predicated region
      $region33: #{kmeans_mha_forward.4} parent=31 // pred_check
        %p464 = pneg %p125
      $region34: #{kmeans_mha_forward.4} parent=31 // pred_check_branch
        %466 = sbr.rel (%p464) target = $region36
      $region35: #{kmeans_mha_forward.4} parent=31 // pred_region
        _
      $region36: #{kmeans_mha_forward.4} parent=31 // pred_fallthru
        _
      // Predicated region
      $region37: #{kmeans_mha_forward.4} parent=31 // pred_check
        %p467 = pneg %p153
      $region38: #{kmeans_mha_forward.4} parent=31 // pred_check_branch
        %469 = sbr.rel (%p467) target = $region40
      $region39: #{kmeans_mha_forward.4} parent=31 // pred_region
        _
      $region40: #{kmeans_mha_forward.4} parent=31 // pred_fallthru
        _
    $region32: #{kmeans_mha_forward.4} parent=5 // pred_fallthru
      _
    %p470 = scmp.le.s32.totalorder 2, %s11
    // Predicated region
    $region41: #{kmeans_mha_forward.4} parent=5 // pred_check
      %p471 = pneg %p470
    $region42: #{kmeans_mha_forward.4} parent=5 // pred_check_branch
      %473 = sbr.rel (%p471) target = $region44
    $region43: #{kmeans_mha_forward.4} parent=5 // pred_region
      %s474 = ssub.s32 %s11, 2
      // Predicated region
      $region45: #{kmeans_mha_forward.4} parent=43 // pred_check
        %p475 = pneg %p131
      $region46: #{kmeans_mha_forward.4} parent=43 // pred_check_branch
        %477 = sbr.rel (%p475) target = $region48
      $region47: #{kmeans_mha_forward.4} parent=43 // pred_region
        %p478 = scmp.lt.s32.totalorder %s22, 1
        %s479 = scalar_select %p478, %s22, 1
        %p480 = scmp.lt.s32.totalorder %s23, 3
        %s481 = scalar_select %p480, %s23, 3
        %s482 = smul.addr %s479, 4
        %s483 = sadd.s32 %s481, %s482
        %s484 = smul.addr %s483, 2
        %s485 = scalar_lea.vmem %s3, %s484
      $region48: #{kmeans_mha_forward.4} parent=43 // pred_fallthru
        _
      // Predicated region
      $region49: #{kmeans_mha_forward.4} parent=43 // pred_check
        %p486 = pneg %p159
      $region50: #{kmeans_mha_forward.4} parent=43 // pred_check_branch
        %488 = sbr.rel (%p486) target = $region52
      $region51: #{kmeans_mha_forward.4} parent=43 // pred_region
        %p489 = scmp.lt.s32.totalorder %s22, 1
        %s490 = scalar_select %p489, %s22, 1
        %p491 = scmp.lt.s32.totalorder %s23, 3
        %s492 = scalar_select %p491, %s23, 3
        %s493 = smul.addr %s490, 4
        %s494 = sadd.s32 %s492, %s493
        %s495 = smul.addr %s494, 2
        %s496 = scalar_lea.vmem %s4, %s495
      $region52: #{kmeans_mha_forward.4} parent=43 // pred_fallthru
        _
    $region44: #{kmeans_mha_forward.4} parent=5 // pred_fallthru
      _
  $region6: #{kmeans_mha_forward.4} parent=0 // loop_footer
    %s15 = sadd.s32 1, %s11
  $region7: #{kmeans_mha_forward.4} parent=0 // loop_footer_branch
    %10 = sbr.rel target = $region3
  $region8: #{kmeans_mha_forward.4} parent=0 // loop_exit
    _

// kernel: kmeans_mha_forward.5
$region0: #{kmeans_mha_forward.5}
  #allocation0 [shape = 'u32[]', space=smem, size = 0x4, offset = 0x4, fixed_abs, tag = 'smem constant byte address 0x4 - core index']
  #allocation1 [shape = 'u32[72,128]{1,0:T(1,128)}', space=vmem, size = 0x9000, scoped, tag = 'internal scratch']
  #allocation2 [shape = 's32[1]{0}', space=sflag, size = 0x4, scoped, tag = 'scoped memory for kmeans_mha_forward.5']
  #allocation3 [shape = 'u8[512]{0}', space=smem, size = 0x200, scoped, tag = 'prefetched SMEM operand 0']
  #allocation4 [shape = 'u8[512]{0}', space=smem, size = 0x200, scoped, tag = 'prefetched SMEM operand 1']
  %s0 = inlined_call_operand.vmem [shape: s32[32], index: 0, kind: input, shape index: {}]
  %s1 = inlined_call_operand.vmem [shape: s32[32], index: 1, kind: input, shape index: {}]
  %s2 = inlined_call_operand.vmem [shape: f32[2,4,16,8], index: 2, kind: input, shape index: {}]
  %s3 = inlined_call_operand.vmem [shape: f32[2,4,16,8], index: 3, kind: input, shape index: {}]
  %s4 = inlined_call_operand.vmem [shape: f32[2,4,16,8], index: 4, kind: input, shape index: {}]
  %s5 = inlined_call_operand.vmem [shape: f32[2,4,16,8], index: 5, kind: output, shape index: {}]
  %s6 = sld [smem:[#allocation0]]
  $region45: #{kmeans_mha_forward.5} parent=0
    _
  %s8 = ssub.s32 1, %s6
  %s9 = scalar_select 0, %s8, %s6
  %s11 = sshll.u32 %s0, 4
  %s12 = int_to_ptr.vmem [resolvable:$true] %s11
  %14 = dma.vmem_to_smem %s12, 16, [#allocation3], [#allocation2]
  %s16 = sshll.u32 %s1, 4
  %s17 = int_to_ptr.vmem [resolvable:$true] %s16
  %19 = dma.vmem_to_smem %s17, 16, [#allocation4], [#allocation2]
  %21 = dma.done [#allocation2], 32
  %22 = sfence
  loop: start=0, step=1, limit=10
  $region2: #{kmeans_mha_forward.5} parent=0 // loop_pre_header
    _
  $region3: #{kmeans_mha_forward.5} parent=0 // loop_header
    %s24 = sphi 0, %s28
    %p25 = scmp.ge.s32.totalorder %s24, 10
    %s31 = sphi 0, %s43
    %s32 = sphi 0, %s39
    %s33 = sphi 0, %s31
    %s34 = sphi 0, %s32
    %s35 = sphi 0, %s33
    %s36 = sphi 0, %s34
    %s48 = sphi 0, %s50
    %s51 = sphi 0, %s48
    %s52 = sphi 0, %s51
    %s68 = sphi 0, %s52
    %s76 = sphi 0, %s78
    %s79 = sphi 0, %s76
    %s80 = sphi 0, %s79
    %s96 = sphi 0, %s80
    %s104 = sphi 0, %s106
    %s107 = sphi 0, %s104
    %s108 = sphi 0, %s107
    %s124 = sphi 0, %s108
    %s132 = sphi 0, %s134
    %s135 = sphi 0, %s132
    %s136 = sphi 0, %s135
    %s152 = sphi 0, %s136
  $region4: #{kmeans_mha_forward.5} parent=0 // loop_header_branch
    %27 = sbr.rel (%p25) target = $region8
  $region5: #{kmeans_mha_forward.5} parent=0 // loop_body
    %s29 = ssub.s32 %s24, 1
    %s30 = ssub.s32 %s24, 2
    %s37 = sadd.s32 1, %s32
    %p38 = scmp.ge.s32.totalorder %s37, 4
    %s39 = scalar_select %p38, 0, %s37
    %s40 = sadd.s32 1, %s31
    %s41 = scalar_select %p38, %s40, %s31
    %p42 = scmp.ge.s32.totalorder %s41, 2
    %s43 = scalar_select %p42, 0, %s41
    %s44 = ssub.s32 %s31, %s43
    %s45 = ssub.s32 %s32, %s39
    %s46 = sor.u32 %s44, %s45
    %p47 = scmp.eq.s32.totalorder %s46, 0
    %s49 = sadd.s32 %s48, 1
    %s50 = scalar_select %p47, %s48, %s49
    %p53 = pneg %p47
    %p54 = scmp.eq.s32.totalorder %s24, 7
    %p55 = por %p53, %p54
    %p56 = scmp.ne.s32.totalorder %s48, %s51
    %p57 = scmp.eq.s32.totalorder %s24, 0
    %p58 = por %p56, %p57
    %p59 = scmp.ne.s32.totalorder %s48, %s51
    %p60 = scmp.eq.s32.totalorder %s29, 7
    %p61 = por %p59, %p60
    %p62 = scmp.ne.s32.totalorder %s51, %s52
    %p63 = scmp.eq.s32.totalorder %s29, 0
    %p64 = por %p62, %p63
    %p65 = scmp.ne.s32.totalorder %s51, %s52
    %p66 = scmp.eq.s32.totalorder %s30, 7
    %p67 = por %p65, %p66
    %p69 = scmp.ne.s32.totalorder %s52, %s68
    %p70 = scmp.eq.s32.totalorder %s30, 0
    %p71 = por %p69, %p70
    %s72 = ssub.s32 %s31, %s43
    %s73 = ssub.s32 %s32, %s39
    %s74 = sor.u32 %s72, %s73
    %p75 = scmp.eq.s32.totalorder %s74, 0
    %s77 = sadd.s32 %s76, 1
    %s78 = scalar_select %p75, %s76, %s77
    %p81 = pneg %p75
    %p82 = scmp.eq.s32.totalorder %s24, 7
    %p83 = por %p81, %p82
    %p84 = scmp.ne.s32.totalorder %s76, %s79
    %p85 = scmp.eq.s32.totalorder %s24, 0
    %p86 = por %p84, %p85
    %p87 = scmp.ne.s32.totalorder %s76, %s79
    %p88 = scmp.eq.s32.totalorder %s29, 7
    %p89 = por %p87, %p88
    %p90 = scmp.ne.s32.totalorder %s79, %s80
    %p91 = scmp.eq.s32.totalorder %s29, 0
    %p92 = por %p90, %p91
    %p93 = scmp.ne.s32.totalorder %s79, %s80
    %p94 = scmp.eq.s32.totalorder %s30, 7
    %p95 = por %p93, %p94
    %p97 = scmp.ne.s32.totalorder %s80, %s96
    %p98 = scmp.eq.s32.totalorder %s30, 0
    %p99 = por %p97, %p98
    %s100 = ssub.s32 %s31, %s43
    %s101 = ssub.s32 %s32, %s39
    %s102 = sor.u32 %s100, %s101
    %p103 = scmp.eq.s32.totalorder %s102, 0
    %s105 = sadd.s32 %s104, 1
    %s106 = scalar_select %p103, %s104, %s105
    %p109 = pneg %p103
    %p110 = scmp.eq.s32.totalorder %s24, 7
    %p111 = por %p109, %p110
    %p112 = scmp.ne.s32.totalorder %s104, %s107
    %p113 = scmp.eq.s32.totalorder %s24, 0
    %p114 = por %p112, %p113
    %p115 = scmp.ne.s32.totalorder %s104, %s107
    %p116 = scmp.eq.s32.totalorder %s29, 7
    %p117 = por %p115, %p116
    %p118 = scmp.ne.s32.totalorder %s107, %s108
    %p119 = scmp.eq.s32.totalorder %s29, 0
    %p120 = por %p118, %p119
    %p121 = scmp.ne.s32.totalorder %s107, %s108
    %p122 = scmp.eq.s32.totalorder %s30, 7
    %p123 = por %p121, %p122
    %p125 = scmp.ne.s32.totalorder %s108, %s124
    %p126 = scmp.eq.s32.totalorder %s30, 0
    %p127 = por %p125, %p126
    %s128 = ssub.s32 %s31, %s43
    %s129 = ssub.s32 %s32, %s39
    %s130 = sor.u32 %s128, %s129
    %p131 = scmp.eq.s32.totalorder %s130, 0
    %s133 = sadd.s32 %s132, 1
    %s134 = scalar_select %p131, %s132, %s133
    %p137 = pneg %p131
    %p138 = scmp.eq.s32.totalorder %s24, 7
    %p139 = por %p137, %p138
    %p140 = scmp.ne.s32.totalorder %s132, %s135
    %p141 = scmp.eq.s32.totalorder %s24, 0
    %p142 = por %p140, %p141
    %p143 = scmp.ne.s32.totalorder %s132, %s135
    %p144 = scmp.eq.s32.totalorder %s29, 7
    %p145 = por %p143, %p144
    %p146 = scmp.ne.s32.totalorder %s135, %s136
    %p147 = scmp.eq.s32.totalorder %s29, 0
    %p148 = por %p146, %p147
    %p149 = scmp.ne.s32.totalorder %s135, %s136
    %p150 = scmp.eq.s32.totalorder %s30, 7
    %p151 = por %p149, %p150
    %p153 = scmp.ne.s32.totalorder %s136, %s152
    %p154 = scmp.eq.s32.totalorder %s30, 0
    %p155 = por %p153, %p154
    %p156 = scmp.le.s32.totalorder 1, %s24
    %p157 = scmp.lt.s32.totalorder %s24, 9
    %p158 = pnand %p156, %p157
    %p159 = pneg %p158
    // Predicated region
    $region9: #{kmeans_mha_forward.5} parent=5 // pred_check
      _
    $region10: #{kmeans_mha_forward.5} parent=5 // pred_check_branch
      %161 = sbr.rel (%p158) target = $region12
    $region11: #{kmeans_mha_forward.5} parent=5 // pred_region
      %s162 = ssub.s32 %s24, 1
    $region12: #{kmeans_mha_forward.5} parent=5 // pred_fallthru
      _
    %p163 = scmp.lt.s32.totalorder %s24, 8
    // Predicated region
    $region13: #{kmeans_mha_forward.5} parent=5 // pred_check
      %p164 = pneg %p163
    $region14: #{kmeans_mha_forward.5} parent=5 // pred_check_branch
      %166 = sbr.rel (%p164) target = $region16
    $region15: #{kmeans_mha_forward.5} parent=5 // pred_region
      // Predicated region
      $region17: #{kmeans_mha_forward.5} parent=15 // pred_check
        %p167 = pneg %p58
      $region18: #{kmeans_mha_forward.5} parent=15 // pred_check_branch
        %169 = sbr.rel (%p167) target = $region20
      $region19: #{kmeans_mha_forward.5} parent=15 // pred_region
        %p170 = scmp.lt.s32.totalorder %s31, 1
        %s171 = scalar_select %p170, %s31, 1
        %p172 = scmp.lt.s32.totalorder %s32, 3
        %s173 = scalar_select %p172, %s32, 3
        %s174 = smul.addr %s173, 2
        %s175 = smul.addr %s171, 8
        %s176 = sadd.s32 %s174, %s175
        %s177 = smul.addr %s176, 8
        %s178 = scalar_lea.vmem %s2, %s177
      $region20: #{kmeans_mha_forward.5} parent=15 // pred_fallthru
        _
      // Predicated region
      $region21: #{kmeans_mha_forward.5} parent=15 // pred_check
        %p179 = pneg %p86
      $region22: #{kmeans_mha_forward.5} parent=15 // pred_check_branch
        %181 = sbr.rel (%p179) target = $region24
      $region23: #{kmeans_mha_forward.5} parent=15 // pred_region
        %p182 = scmp.lt.s32.totalorder %s31, 1
        %s183 = scalar_select %p182, %s31, 1
        %p184 = scmp.lt.s32.totalorder %s32, 3
        %s185 = scalar_select %p184, %s32, 3
        %s186 = smul.addr %s185, 2
        %s187 = smul.addr %s183, 8
        %s188 = sadd.s32 %s186, %s187
        %s189 = smul.addr %s188, 8
        %s190 = scalar_lea.vmem %s3, %s189
      $region24: #{kmeans_mha_forward.5} parent=15 // pred_fallthru
        _
      // Predicated region
      $region25: #{kmeans_mha_forward.5} parent=15 // pred_check
        %p191 = pneg %p114
      $region26: #{kmeans_mha_forward.5} parent=15 // pred_check_branch
        %193 = sbr.rel (%p191) target = $region28
      $region27: #{kmeans_mha_forward.5} parent=15 // pred_region
        %p194 = scmp.lt.s32.totalorder %s31, 1
        %s195 = scalar_select %p194, %s31, 1
        %p196 = scmp.lt.s32.totalorder %s32, 3
        %s197 = scalar_select %p196, %s32, 3
        %s198 = smul.addr %s197, 2
        %s199 = smul.addr %s195, 8
        %s200 = sadd.s32 %s198, %s199
        %s201 = smul.addr %s200, 8
        %s202 = scalar_lea.vmem %s4, %s201
      $region28: #{kmeans_mha_forward.5} parent=15 // pred_fallthru
        _
    $region16: #{kmeans_mha_forward.5} parent=5 // pred_fallthru
      _
    %p203 = scmp.le.s32.totalorder 1, %s24
    %p204 = scmp.lt.s32.totalorder %s24, 9
    %p205 = pnand %p203, %p204
    %p206 = pneg %p205
    // Predicated region
    $region29: #{kmeans_mha_forward.5} parent=5 // pred_check
      _
    $region30: #{kmeans_mha_forward.5} parent=5 // pred_check_branch
      %208 = sbr.rel (%p205) target = $region32
    $region31: #{kmeans_mha_forward.5} parent=5 // pred_region
      %s209 = ssub.s32 %s24, 1
      %p210 = scmp.lt.s32.totalorder %s33, 1
      %s211 = scalar_select %p210, %s33, 1
      %p212 = scmp.lt.s32.totalorder %s34, 3
      %s213 = scalar_select %p212, %s34, 3
      %s214 = smul.addr %s213, 2
      %s215 = smul.addr %s211, 8
      %s216 = sadd.s32 %s214, %s215
      %s217 = smul.addr %s216, 8
      %s218 = scalar_lea.vmem %s2, %s217
      %p219 = pneg %p64
      %p220 = pneg %p61
      %p221 = scmp.lt.s32.totalorder %s33, 1
      %s222 = scalar_select %p221, %s33, 1
      %p223 = scmp.lt.s32.totalorder %s34, 3
      %s224 = scalar_select %p223, %s34, 3
      %s225 = smul.addr %s224, 2
      %s226 = smul.addr %s222, 8
      %s227 = sadd.s32 %s225, %s226
      %s228 = smul.addr %s227, 8
      %s229 = scalar_lea.vmem %s3, %s228
      %p230 = pneg %p92
      %p231 = pneg %p89
      %p232 = scmp.lt.s32.totalorder %s33, 1
      %s233 = scalar_select %p232, %s33, 1
      %p234 = scmp.lt.s32.totalorder %s34, 3
      %s235 = scalar_select %p234, %s34, 3
      %s236 = smul.addr %s235, 2
      %s237 = smul.addr %s233, 8
      %s238 = sadd.s32 %s236, %s237
      %s239 = smul.addr %s238, 8
      %s240 = scalar_lea.vmem %s4, %s239
      %p241 = pneg %p120
      %p242 = pneg %p117
      %p243 = pneg %p148
      %p244 = pneg %p145
      %p245 = scmp.lt.s32.totalorder %s33, 1
      %s246 = scalar_select %p245, %s33, 1
      %p247 = scmp.lt.s32.totalorder %s34, 3
      %s248 = scalar_select %p247, %s34, 3
      %s249 = smul.addr %s248, 2
      %s250 = smul.addr %s246, 8
      %s251 = sadd.s32 %s249, %s250
      %s252 = smul.addr %s251, 8
      %s253 = scalar_lea.vmem %s5, %s252
      %p254 = scmp.lt.s32.totalorder %s33, 1
      %s255 = scalar_select %p254, %s33, 1
      %p256 = scmp.lt.s32.totalorder %s34, 3
      %s257 = scalar_select %p256, %s34, 3
      %s258 = smul.addr %s257, 2
      %s259 = smul.addr %s255, 8
      %s260 = sadd.s32 %s258, %s259
      %s261 = smul.addr %s260, 8
      %s262 = scalar_lea.vmem %s2, %s261
      %p263 = scmp.lt.s32.totalorder %s33, 1
      %s264 = scalar_select %p263, %s33, 1
      %p265 = scmp.lt.s32.totalorder %s34, 3
      %s266 = scalar_select %p265, %s34, 3
      %s267 = smul.addr %s266, 2
      %s268 = smul.addr %s264, 8
      %s269 = sadd.s32 %s267, %s268
      %s270 = smul.addr %s269, 8
      %s271 = scalar_lea.vmem %s3, %s270
      %p272 = scmp.lt.s32.totalorder %s33, 1
      %s273 = scalar_select %p272, %s33, 1
      %p274 = scmp.lt.s32.totalorder %s34, 3
      %s275 = scalar_select %p274, %s34, 3
      %s276 = smul.addr %s275, 2
      %s277 = smul.addr %s273, 8
      %s278 = sadd.s32 %s276, %s277
      %s279 = smul.addr %s278, 8
      %s280 = scalar_lea.vmem %s4, %s279
      %p281 = scmp.lt.s32.totalorder %s33, 1
      %s282 = scalar_select %p281, %s33, 1
      %p283 = scmp.lt.s32.totalorder %s34, 3
      %s284 = scalar_select %p283, %s34, 3
      %s285 = smul.addr %s284, 2
      %s286 = smul.addr %s282, 8
      %s287 = sadd.s32 %s285, %s286
      %s288 = smul.addr %s287, 8
      %s289 = scalar_lea.vmem %s5, %s288
      %s290 = smul.u32 %s33, 4
      %s291 = sadd.s32 %s290, %s34
      %s292 = smul.u32 %s291, 4
      %v293 = vld [vmem:[%s262] sm:$0xff]
      %v294 = vld [vmem:[%s262 + $0x8] sm:$0xff]
      %vm295 = vcmask 64512
      %v296 = vsel %vm295, %v293, 0.0
      %v297 = vsel %vm295, %v294, 0.0
      %v298 = vadd.f32 %v296, %v297
      %299 = vadd.xlane.f32.xlu0 %v298
      %v300 = vpop.xlane.xlu0 %299
      %v301 = vrot.slane %v300, 4
      %v302 = vadd.f32 %v300, %v301
      %v303 = vrot.slane %v302, 2
      %v304 = vadd.f32 %v302, %v303
      %v305 = vrot.slane %v304, 1
      %v306 = vadd.f32 %v304, %v305
      %s307 = vtos %v306
      %v308 = vstv %s307
      %v309 = vrcp.pop 128.0
      %v310 = vmul.f32 128.0, %v309
      %v311 = vsub.f32 1.0, %v310
      %v312 = vmul.f32 %v309, %v311
      %v313 = vadd.f32 %v309, %v312
      %vm314 = vweird.f32 %v309
      %v315 = vsel %vm314, %v309, %v313
      %v316 = vmul.f32 %v308, %v315
      %v317 = vsub.f32 %v293, %v316
      %v318 = vsub.f32 %v294, %v316
      %v319 = vmul.f32 %v317, %v317
      %v320 = vmul.f32 %v318, %v318
      %v321 = vsel %vm295, %v319, 0.0
      %v322 = vsel %vm295, %v320, 0.0
      %v323 = vadd.f32 %v321, %v322
      %324 = vadd.xlane.f32.xlu0 %v323
      %v325 = vpop.xlane.xlu0 %324
      %v326 = vrot.slane %v325, 4
      %v327 = vadd.f32 %v325, %v326
      %v328 = vrot.slane %v327, 2
      %v329 = vadd.f32 %v327, %v328
      %v330 = vrot.slane %v329, 1
      %v331 = vadd.f32 %v329, %v330
      %s332 = vtos %v331
      %v333 = vstv %s332
      %v334 = vmul.f32 %v333, %v315
      %v335 = vadd.f32 %v334, 1e-05
      %v336 = vrsqrt.pop %v335
      %v337 = vmul.f32 %v336, %v335
      %v338 = vmul.f32 %v337, %v336
      %v339 = vmul.f32 0.5, %v338
      %v340 = vsub.f32 1.5, %v339
      %v341 = vmul.f32 %v336, %v340
      %vm342 = vweird.f32 %v335
      %vm343 = vweird.f32 %v336
      %vm344 = vmor %vm342, %vm343
      %v345 = vsel %vm344, %v336, %v341
      %v346 = vld [vmem:[%s271] sm:$0xff]
      %v347 = vld [vmem:[%s271 + $0x8] sm:$0xff]
      %v348 = vsel %vm295, %v346, 0.0
      %v349 = vsel %vm295, %v347, 0.0
      %v350 = vadd.f32 %v348, %v349
      %351 = vadd.xlane.f32.xlu0 %v350
      %v352 = vpop.xlane.xlu0 %351
      %v353 = vrot.slane %v352, 4
      %v354 = vadd.f32 %v352, %v353
      %v355 = vrot.slane %v354, 2
      %v356 = vadd.f32 %v354, %v355
      %v357 = vrot.slane %v356, 1
      %v358 = vadd.f32 %v356, %v357
      %s359 = vtos %v358
      %v360 = vstv %s359
      %v361 = vmul.f32 %v360, %v315
      %v362 = vsub.f32 %v346, %v361
      %v363 = vsub.f32 %v347, %v361
      %v364 = vmul.f32 %v362, %v362
      %v365 = vmul.f32 %v363, %v363
      %v366 = vsel %vm295, %v364, 0.0
      %v367 = vsel %vm295, %v365, 0.0
      %v368 = vadd.f32 %v366, %v367
      %369 = vadd.xlane.f32.xlu0 %v368
      %v370 = vpop.xlane.xlu0 %369
      %v371 = vrot.slane %v370, 4
      %v372 = vadd.f32 %v370, %v371
      %v373 = vrot.slane %v372, 2
      %v374 = vadd.f32 %v372, %v373
      %v375 = vrot.slane %v374, 1
      %v376 = vadd.f32 %v374, %v375
      %s377 = vtos %v376
      %v378 = vstv %s377
      %v379 = vmul.f32 %v378, %v315
      %v380 = vadd.f32 %v379, 1e-05
      %v381 = vrsqrt.pop %v380
      %v382 = vmul.f32 %v381, %v380
      %v383 = vmul.f32 %v382, %v381
      %v384 = vmul.f32 0.5, %v383
      %v385 = vsub.f32 1.5, %v384
      %v386 = vmul.f32 %v381, %v385
      %vm387 = vweird.f32 %v380
      %vm388 = vweird.f32 %v381
      %vm389 = vmor %vm387, %vm388
      %v390 = vsel %vm389, %v381, %v386
      %s391 = sld [smem:[#allocation3 + %s292]]
      %s392 = scalar_lea.vmem %s262, %s391
      %v393 = vld [vmem:[%s392] sm:$0x1]
      %s394 = sadd.s32 %s292, 1
      %s395 = sld [smem:[#allocation3 + %s394]]
      %s396 = scalar_lea.vmem %s262, %s395
      %v397 = vld [vmem:[%s396] sm:$0x1]
      %s398 = sadd.s32 %s292, 2
      %s399 = sld [smem:[#allocation3 + %s398]]
      %s400 = scalar_lea.vmem %s262, %s399
      %v401 = vld [vmem:[%s400] sm:$0x1]
      %s402 = sadd.s32 %s292, 3
      %s403 = sld [smem:[#allocation3 + %s402]]
      %s404 = scalar_lea.vmem %s262, %s403
      %v405 = vld [vmem:[%s404] sm:$0x1]
      %v407 = vrot.slane %v397, 7
      %v410 = vrot.slane %v401, 6
      %v413 = vrot.slane %v405, 5
      %vm415 = vcmask 1040384
      %v416 = vsel %vm415, %v393, %v407
      %vm417 = vcmask 1041408
      %v418 = vsel %vm417, %v416, %v410
      %vm419 = vcmask 1042432
      %v420 = vsel %vm419, %v418, %v413
      %s421 = sld [smem:[#allocation4 + %s292]]
      %s422 = scalar_lea.vmem %s271, %s421
      %v423 = vld [vmem:[%s422] sm:$0x1]
      %s424 = sld [smem:[#allocation4 + %s394]]
      %s425 = scalar_lea.vmem %s271, %s424
      %v426 = vld [vmem:[%s425] sm:$0x1]
      %s427 = sld [smem:[#allocation4 + %s398]]
      %s428 = scalar_lea.vmem %s271, %s427
      %v429 = vld [vmem:[%s428] sm:$0x1]
      %s430 = sld [smem:[#allocation4 + %s402]]
      %s431 = scalar_lea.vmem %s271, %s430
      %v432 = vld [vmem:[%s431] sm:$0x1]
      %v434 = vrot.slane %v426, 7
      %v437 = vrot.slane %v429, 6
      %v440 = vrot.slane %v432, 5
      %v442 = vsel %vm415, %v423, %v434
      %v443 = vsel %vm417, %v442, %v437
      %v444 = vsel %vm419, %v443, %v440
      %s445 = scalar_lea.vmem %s280, %s421
      %v446 = vld [vmem:[%s445] sm:$0x1]
      %s447 = scalar_lea.vmem %s280, %s424
      %v448 = vld [vmem:[%s447] sm:$0x1]
      %s449 = scalar_lea.vmem %s280, %s427
      %v450 = vld [vmem:[%s449] sm:$0x1]
      %s451 = scalar_lea.vmem %s280, %s430
      %v452 = vld [vmem:[%s451] sm:$0x1]
      %v454 = vrot.slane %v448, 7
      %v457 = vrot.slane %v450, 6
      %v460 = vrot.slane %v452, 5
      %v462 = vsel %vm415, %v446, %v454
      %v463 = vsel %vm417, %v462, %v457
      %v464 = vsel %vm419, %v463, %v460
      %v465 = vsub.f32 %v420, %v316
      %v466 = vmul.f32 %v465, %v345
      %v468 = vrot.slane %v466, 2
      %v469 = vsub.f32 %v444, %v361
      %v470 = vmul.f32 %v469, %v390
      %v472 = vrot.slane %v470, 2
      %v474 = vrot.slane %v464, 2
      %v475 = vsel %vm295, %v466, 0
      %v477 = vsel %vm295, %v470, 0
      %479 = vmatpush.xpose.msra.mxu0 0.0
      %480 = vmatpush.xpose.msra.mxu0 0.0
      %481 = vmatpush.xpose.msra.mxu0 0.0
      %482 = vmatpush.xpose.msra.mxu0 0.0
      %483 = vmatpush.xpose.msra.mxu0 0.0
      %484 = vmatpush.xpose.msra.mxu0 0.0
      %485 = vmatpush.xpose.msra.mxu0 0.0
      %486 = vmatpush.xpose.msra.mxu0 0.0
      %487 = vmatpush.xpose.msra.mxu0 0.0
      %488 = vmatpush.xpose.msra.mxu0 0.0
      %489 = vmatpush.xpose.msra.mxu0 0.0
      %490 = vmatpush.xpose.msra.mxu0 0.0
      %491 = vmatpush.xpose.msra.mxu0 0.0
      %492 = vmatpush.xpose.msra.mxu0 0.0
      %493 = vmatpush.xpose.msra.mxu0 0.0
      %494 = vmatpush.xpose.msra.mxu0 %v477
      %495 = vmatmul.f32.gmra.mxu0 %v475
      %v496 = vpop.f32.mrf.mxu0
      %v497 = vadd.f32 0.0, %v496
      %498 = vdwg.mxu0
      %v499 = vsel %vm295, %v468, 0
      %v501 = vsel %vm295, %v472, 0
      %503 = vmatpush.xpose.msra.mxu0 0.0
      %504 = vmatpush.xpose.msra.mxu0 0.0
      %505 = vmatpush.xpose.msra.mxu0 0.0
      %506 = vmatpush.xpose.msra.mxu0 0.0
      %507 = vmatpush.xpose.msra.mxu0 0.0
      %508 = vmatpush.xpose.msra.mxu0 0.0
      %509 = vmatpush.xpose.msra.mxu0 0.0
      %510 = vmatpush.xpose.msra.mxu0 0.0
      %511 = vmatpush.xpose.msra.mxu0 0.0
      %512 = vmatpush.xpose.msra.mxu0 0.0
      %513 = vmatpush.xpose.msra.mxu0 0.0
      %514 = vmatpush.xpose.msra.mxu0 0.0
      %515 = vmatpush.xpose.msra.mxu0 0.0
      %516 = vmatpush.xpose.msra.mxu0 0.0
      %517 = vmatpush.xpose.msra.mxu0 0.0
      %518 = vmatpush.xpose.msra.mxu0 %v501
      %519 = vmatmul.f32.gmra.mxu0 %v499
      %v520 = vpop.f32.mrf.mxu0
      %v521 = vadd.f32 0.0, %v520
      %522 = vdwg.mxu0
      %vm523 = vcmask 9216
      %v524 = vsel %vm523, %v497, -inf
      %525 = vmax.xlane.f32.xlu0 %v524
      %v526 = vpop.xlane.xlu0 %525
      %v527 = vsel %vm523, %v521, -inf
      %528 = vmax.xlane.f32.xlu0 %v527
      %v529 = vpop.xlane.xlu0 %528
      %v530 = vsub.f32 %v497, %v526
      %v531 = vsub.f32 %v521, %v529
      %v532 = vmul.f32 %v530, 1.442695
      %v533 = vpow.pop %v532
      %v534 = vmul.f32 %v531, 1.442695
      %v535 = vpow.pop %v534
      %v536 = vsel %vm523, %v533, 0.0
      %537 = vadd.xlane.f32.xlu0 %v536
      %v538 = vpop.xlane.xlu0 %537
      %v539 = vsel %vm523, %v535, 0.0
      %540 = vadd.xlane.f32.xlu0 %v539
      %v541 = vpop.xlane.xlu0 %540
      %v542 = vrcp.pop %v538
      %v543 = vmul.f32 %v538, %v542
      %v544 = vsub.f32 1.0, %v543
      %v545 = vmul.f32 %v542, %v544
      %v546 = vadd.f32 %v542, %v545
      %vm547 = vweird.f32 %v538
      %vm548 = vweird.f32 %v542
      %vm549 = vmor %vm547, %vm548
      %v550 = vsel %vm549, %v542, %v546
      %v551 = vand.u32 2147483647, %v538
      %vm552 = vcmp.eq.f32.partialorder %v551, 8.507059e+37
      %v553 = vand.u32 %v538, 2147483648
      %v554 = vor.u32 1.1754944e-38, %v553
      %v555 = vsel %vm552, %v554, %v550
      %v556 = vmul.f32 %v533, %v555
      %v557 = vrcp.pop %v541
      %v558 = vmul.f32 %v541, %v557
      %v559 = vsub.f32 1.0, %v558
      %v560 = vmul.f32 %v557, %v559
      %v561 = vadd.f32 %v557, %v560
      %vm562 = vweird.f32 %v541
      %vm563 = vweird.f32 %v557
      %vm564 = vmor %vm562, %vm563
      %v565 = vsel %vm564, %v557, %v561
      %v566 = vand.u32 2147483647, %v541
      %vm567 = vcmp.eq.f32.partialorder %v566, 8.507059e+37
      %v568 = vand.u32 %v541, 2147483648
      %v569 = vor.u32 1.1754944e-38, %v568
      %v570 = vsel %vm567, %v569, %v565
      %v571 = vmul.f32 %v535, %v570
      %vm572 = vcmask 15360
      %v574 = vsel %vm572, %v556, 0
      %v576 = vsel %vm417, %v464, 0
      %578 = vmatpush.msra.mxu0 0.0
      %579 = vmatpush.msra.mxu0 0.0
      %580 = vmatpush.msra.mxu0 0.0
      %581 = vmatpush.msra.mxu0 0.0
      %582 = vmatpush.msra.mxu0 0.0
      %583 = vmatpush.msra.mxu0 0.0
      %584 = vmatpush.msra.mxu0 0.0
      %585 = vmatpush.msra.mxu0 0.0
      %586 = vmatpush.msra.mxu0 0.0
      %587 = vmatpush.msra.mxu0 0.0
      %588 = vmatpush.msra.mxu0 0.0
      %589 = vmatpush.msra.mxu0 0.0
      %590 = vmatpush.msra.mxu0 0.0
      %591 = vmatpush.msra.mxu0 0.0
      %592 = vmatpush.msra.mxu0 0.0
      %593 = vmatpush.msra.mxu0 %v576
      %594 = vmatmul.f32.gmra.mxu0 %v574
      %v595 = vpop.f32.mrf.mxu0
      %v596 = vadd.f32 0.0, %v595
      %597 = vdwg.mxu0
      %v599 = vsel %vm572, %v571, 0
      %v601 = vsel %vm417, %v474, 0
      %603 = vmatpush.msra.mxu0 0.0
      %604 = vmatpush.msra.mxu0 0.0
      %605 = vmatpush.msra.mxu0 0.0
      %606 = vmatpush.msra.mxu0 0.0
      %607 = vmatpush.msra.mxu0 0.0
      %608 = vmatpush.msra.mxu0 0.0
      %609 = vmatpush.msra.mxu0 0.0
      %610 = vmatpush.msra.mxu0 0.0
      %611 = vmatpush.msra.mxu0 0.0
      %612 = vmatpush.msra.mxu0 0.0
      %613 = vmatpush.msra.mxu0 0.0
      %614 = vmatpush.msra.mxu0 0.0
      %615 = vmatpush.msra.mxu0 0.0
      %616 = vmatpush.msra.mxu0 0.0
      %617 = vmatpush.msra.mxu0 0.0
      %618 = vmatpush.msra.mxu0 %v601
      %619 = vmatmul.f32.gmra.mxu0 %v599
      %v620 = vpop.f32.mrf.mxu0
      %v621 = vadd.f32 0.0, %v620
      %622 = vdwg.mxu0
      %v623 = vlaneseq
      %v624 = vand.u32 %v623, 127
      %v625 = vstv %s421
      %vm626 = vcmp.eq.s32.totalorder %v624, %v625
      %v627 = vsel %vm626, 1, 0
      %v628 = vcvt.s32.f32 %v627
      %v629 = vstv %s424
      %vm630 = vcmp.eq.s32.totalorder %v624, %v629
      %v631 = vsel %vm630, 1, 0
      %v632 = vcvt.s32.f32 %v631
      %v633 = vstv %s427
      %vm634 = vcmp.eq.s32.totalorder %v624, %v633
      %v635 = vsel %vm634, 1, 0
      %v636 = vcvt.s32.f32 %v635
      %v637 = vstv %s430
      %vm638 = vcmp.eq.s32.totalorder %v624, %v637
      %v639 = vsel %vm638, 1, 0
      %v640 = vcvt.s32.f32 %v639
      %v641 = vsel %vm415, %v628, %v632
      %v642 = vsel %vm417, %v641, %v636
      %v643 = vsel %vm419, %v642, %v640
      %644 = vxpose.xlu0.b32.start [1/16] %v643, 128
      %645 = vxpose.xlu0.b32.cont [2/16] 0.0, 128
      %646 = vxpose.xlu0.b32.cont [3/16] 0.0, 128
      %647 = vxpose.xlu0.b32.cont [4/16] 0.0, 128
      %648 = vxpose.xlu0.b32.cont [5/16] 0.0, 128
      %649 = vxpose.xlu0.b32.cont [6/16] 0.0, 128
      %650 = vxpose.xlu0.b32.cont [7/16] 0.0, 128
      %651 = vxpose.xlu0.b32.cont [8/16] 0.0, 128
      %652 = vxpose.xlu0.b32.cont [9/16] 0.0, 128
      %653 = vxpose.xlu0.b32.cont [10/16] 0.0, 128
      %654 = vxpose.xlu0.b32.cont [11/16] 0.0, 128
      %655 = vxpose.xlu0.b32.cont [12/16] 0.0, 128
      %656 = vxpose.xlu0.b32.cont [13/16] 0.0, 128
      %657 = vxpose.xlu0.b32.cont [14/16] 0.0, 128
      %658 = vxpose.xlu0.b32.cont [15/16] 0.0, 128
      %659 = vxpose.xlu0.b32.end [16/16] 0.0, 128
      %v660 = vpop.trf.xlu0
      %v661 = vpop.trf.xlu0
      %v662 = vpop.trf.xlu0
      %v663 = vpop.trf.xlu0
      %v664 = vpop.trf.xlu0
      %v665 = vpop.trf.xlu0
      %v666 = vpop.trf.xlu0
      %v667 = vpop.trf.xlu0
      %v668 = vpop.trf.xlu0
      %v669 = vpop.trf.xlu0
      %v670 = vpop.trf.xlu0
      %v671 = vpop.trf.xlu0
      %v672 = vpop.trf.xlu0
      %v673 = vpop.trf.xlu0
      %v674 = vpop.trf.xlu0
      %v675 = vpop.trf.xlu0
      %678 = vst [vmem:[#allocation1] ss:$4 sm:$0xff] %v596
      %s679 = scalar_lea.vmem [#allocation1], 1
      %680 = vst [vmem:[%s679] ss:$4 sm:$0xff] %v621
      %v681 = vld.sshfl [vmem:[#allocation1] sm:$0xff pattern:$0x73625140]
      %vm682 = vcmask 31744
      %v684 = vsel %vm682, %v660, 0
      %v687 = vsel %vm682, %v661, 0
      %vm689 = vcmask 1043456
      %v690 = vsel %vm689, %v681, 0
      %692 = vmatpush.msra.mxu0 0.0
      %693 = vmatpush.msra.mxu0 0.0
      %694 = vmatpush.msra.mxu0 0.0
      %695 = vmatpush.msra.mxu0 0.0
      %696 = vmatpush.msra.mxu0 0.0
      %697 = vmatpush.msra.mxu0 0.0
      %698 = vmatpush.msra.mxu0 0.0
      %699 = vmatpush.msra.mxu0 0.0
      %700 = vmatpush.msra.mxu0 0.0
      %701 = vmatpush.msra.mxu0 0.0
      %702 = vmatpush.msra.mxu0 0.0
      %703 = vmatpush.msra.mxu0 0.0
      %704 = vmatpush.msra.mxu0 0.0
      %705 = vmatpush.msra.mxu0 0.0
      %706 = vmatpush.msra.mxu0 0.0
      %707 = vmatpush.msra.mxu0 %v690
      %708 = vmatmul.f32.gmra.mxu0 %v684
      %v709 = vpop.f32.mrf.mxu0
      %v710 = vadd.f32 0.0, %v709
      %711 = vmatmul.f32.gmra.mxu0 %v687
      %v712 = vpop.f32.mrf.mxu0
      %v713 = vadd.f32 0.0, %v712
      %714 = vdwg.mxu0
      %v715 = vmul.f32 %v710, 100000.0
      %v716 = vmul.f32 %v713, 100000.0
      %717 = vst.msk [vmem:[%s289] sm:$0xff] %vm295, %v715
      %718 = vst.msk [vmem:[%s289 + $0x8] sm:$0xff] %vm295, %v716
      %p719 = scmp.lt.s32.totalorder %s33, 1
      %s720 = scalar_select %p719, %s33, 1
      %p721 = scmp.lt.s32.totalorder %s34, 3
      %s722 = scalar_select %p721, %s34, 3
      %s723 = smul.addr %s722, 2
      %s724 = smul.addr %s720, 8
      %s725 = sadd.s32 %s723, %s724
      %s726 = smul.addr %s725, 8
      %s727 = scalar_lea.vmem %s5, %s726
      // Predicated region
      $region33: #{kmeans_mha_forward.5} parent=31 // pred_check
        %p728 = pneg %p145
      $region34: #{kmeans_mha_forward.5} parent=31 // pred_check_branch
        %730 = sbr.rel (%p728) target = $region36
      $region35: #{kmeans_mha_forward.5} parent=31 // pred_region
        _
      $region36: #{kmeans_mha_forward.5} parent=31 // pred_fallthru
        _
    $region32: #{kmeans_mha_forward.5} parent=5 // pred_fallthru
      _
    %p731 = scmp.le.s32.totalorder 2, %s24
    // Predicated region
    $region37: #{kmeans_mha_forward.5} parent=5 // pred_check
      %p732 = pneg %p731
    $region38: #{kmeans_mha_forward.5} parent=5 // pred_check_branch
      %734 = sbr.rel (%p732) target = $region40
    $region39: #{kmeans_mha_forward.5} parent=5 // pred_region
      %s735 = ssub.s32 %s24, 2
      // Predicated region
      $region41: #{kmeans_mha_forward.5} parent=39 // pred_check
        %p736 = pneg %p151
      $region42: #{kmeans_mha_forward.5} parent=39 // pred_check_branch
        %738 = sbr.rel (%p736) target = $region44
      $region43: #{kmeans_mha_forward.5} parent=39 // pred_region
        %p739 = scmp.lt.s32.totalorder %s35, 1
        %s740 = scalar_select %p739, %s35, 1
        %p741 = scmp.lt.s32.totalorder %s36, 3
        %s742 = scalar_select %p741, %s36, 3
        %s743 = smul.addr %s742, 2
        %s744 = smul.addr %s740, 8
        %s745 = sadd.s32 %s743, %s744
        %s746 = smul.addr %s745, 8
        %s747 = scalar_lea.vmem %s5, %s746
      $region44: #{kmeans_mha_forward.5} parent=39 // pred_fallthru
        _
    $region40: #{kmeans_mha_forward.5} parent=5 // pred_fallthru
      _
  $region6: #{kmeans_mha_forward.5} parent=0 // loop_footer
    %s28 = sadd.s32 1, %s24
  $region7: #{kmeans_mha_forward.5} parent=0 // loop_footer_branch
    %23 = sbr.rel target = $region3
  $region8: #{kmeans_mha_forward.5} parent=0 // loop_exit
    _

</llo_original>
